<compile_context>
chip_gen: v6e
topology: v6e:2x2x1
jax: 0.10.0
libtpu: 0.0.40
codegen_flags: <defaults>
</compile_context>

<pallas_src>
import functools

import jax
import jax.numpy as jnp
from jax.experimental import pallas as pl
from jax.experimental.pallas import tpu as pltpu

HIDDEN = 128          # module forces hidden_size = 128
TEACHER_DIM = 768
FC1_OUT = HIDDEN * 2  # 256
NUM_CLASSES = 2
P_DROP = 0.2          # F.dropout(p=0.2), functional default training=True


def _avg_pre_classify_kernel(enc_ref, teach_ref, mask_e_ref, mask_t_ref,
                             w1e_ref, w1t_ref, b1_ref, w2_ref, b2_ref,
                             out_ref, acc_ref, *,
                             batch, enc_dim, teach_dim,
                             seq_enc, seq_teach, tile_rows):
    k = pl.program_id(0)

    @pl.when(k == 0)
    def _init():
        acc_ref[...] = jnp.zeros_like(acc_ref)

    # Partial sum of this teacher tile: (tile_rows, B*768) -> (1, B*768).
    x = teach_ref[...].astype(jnp.float32)
    if seq_teach % tile_rows != 0:
        # Mask padded rows of the final partial tile (trace-time branch: free
        # when the tiling is exact).
        rows = jax.lax.broadcasted_iota(jnp.int32, x.shape, 0) + k * tile_rows
        x = jnp.where(rows < seq_teach, x, 0.0)
    acc_ref[...] += jnp.sum(x, axis=0, keepdims=True)

    @pl.when(k == pl.num_programs(0) - 1)
    def _finalize():
        # Sequence means, kept lane-flat: (1, B*H).
        enc_mean = (jnp.sum(enc_ref[...].astype(jnp.float32), axis=0, keepdims=True)
                    * (1.0 / seq_enc))
        teach_mean = acc_ref[...] * (1.0 / seq_teach)

        # Training-mode dropout: masks are pre-scaled keep/(1-p) multipliers.
        enc_d = enc_mean * mask_e_ref[...]
        teach_d = teach_mean * mask_t_ref[...]

        w1e = w1e_ref[...]
        w1t = w1t_ref[...]
        b1 = b1_ref[...]
        w2 = w2_ref[...]
        b2 = b2_ref[...]

        # Tiny epilogue, unrolled over the small batch.  Lane-aligned static
        # slices of the flat means avoid any in-kernel lane->sublane reshape.
        # (For large B this would become a single (B,896)@(896,256) matmul.)
        for b in range(batch):
            e_b = enc_d[:, b * enc_dim:(b + 1) * enc_dim]       # (1, 128)
            t_b = teach_d[:, b * teach_dim:(b + 1) * teach_dim]  # (1, 768)
            h = (jnp.dot(e_b, w1e, preferred_element_type=jnp.float32)
                 + jnp.dot(t_b, w1t, preferred_element_type=jnp.float32)
                 + b1)                                           # (1, 256)
            h = jnp.where(h >= 0.0, h, 0.2 * h)                  # LeakyReLU(0.2)
            o = jnp.dot(h, w2, preferred_element_type=jnp.float32) + b2  # (1, 2)
            out_ref[pl.ds(b, 1), :] = o.astype(out_ref.dtype)


def _pick_tile_rows(seq_len, row_bytes, target_bytes=4 << 20):
    """Rows per teacher tile: full array if it fits, else a multiple of 8 sized
    to ~target_bytes per (double-)buffer -> safe on v5e/v6e/v7x scoped VMEM."""
    if seq_len * row_bytes <= target_bytes:
        return seq_len
    rows = max(8, int(target_bytes // row_bytes) // 8 * 8)
    return min(rows, seq_len)


@jax.jit
def average_pre_classify(encoder_outputs, teacher_encoder_outputs, params, dropout_key):
    """encoder_outputs: (S_enc, B, 128); teacher_encoder_outputs: (S_t, B, 768) -> (B, 2)."""
    seq_e, batch, enc_dim = encoder_outputs.shape
    seq_t, batch_t, teach_dim = teacher_encoder_outputs.shape
    assert batch == batch_t

    # Lane-dense 2-D slabs (free row-major reshape): sequence on sublanes, B*H on lanes.
    enc2d = encoder_outputs.reshape(seq_e, batch * enc_dim)
    teach2d = teacher_encoder_outputs.reshape(seq_t, batch * teach_dim)

    row_bytes = batch * teach_dim * teacher_encoder_outputs.dtype.itemsize
    tile_rows = _pick_tile_rows(seq_t, row_bytes)
    grid = (pl.cdiv(seq_t, tile_rows),)

    # PyTorch Linear stores weight as (out, in); split fc1 to avoid the concat.
    w1 = params["fc1_w"]                       # (256, 896)
    w1e = w1[:, :enc_dim].T                    # (128, 256)
    w1t = w1[:, enc_dim:].T                    # (768, 256)
    b1 = params["fc1_b"].reshape(1, FC1_OUT)
    w2 = params["fc2_w"].T                     # (256, 2)
    b2 = params["fc2_b"].reshape(1, NUM_CLASSES)

    # Training-mode dropout, generated host-side with jax.random (flat layout).
    # TODO(synk): exact PyTorch RNG stream is not reproducible; the mask has the
    # same keep-probability / 1/(1-p) scaling semantics but different randoms.
    ke, kt = jax.random.split(dropout_key)
    keep = 1.0 - P_DROP
    mask_e = jax.random.bernoulli(ke, keep, (1, batch * enc_dim)).astype(jnp.float32) / keep
    mask_t = jax.random.bernoulli(kt, keep, (1, batch * teach_dim)).astype(jnp.float32) / keep

    kernel = functools.partial(
        _avg_pre_classify_kernel,
        batch=batch, enc_dim=enc_dim, teach_dim=teach_dim,
        seq_enc=seq_e, seq_teach=seq_t, tile_rows=tile_rows)

    const = lambda k: (0, 0)
    return pl.pallas_call(
        kernel,
        out_shape=jax.ShapeDtypeStruct((batch, NUM_CLASSES), jnp.float32),
        grid=grid,
        in_specs=[
            pl.BlockSpec((seq_e, batch * enc_dim), const),                    # encoder (resident)
            pl.BlockSpec((tile_rows, batch * teach_dim), lambda k: (k, 0)),   # teacher (streamed)
            pl.BlockSpec((1, batch * enc_dim), const),                        # dropout mask (enc)
            pl.BlockSpec((1, batch * teach_dim), const),                      # dropout mask (teacher)
            pl.BlockSpec((enc_dim, FC1_OUT), const),                          # w1_enc
            pl.BlockSpec((teach_dim, FC1_OUT), const),                        # w1_teach
            pl.BlockSpec((1, FC1_OUT), const),                                # b1
            pl.BlockSpec((FC1_OUT, NUM_CLASSES), const),                      # w2
            pl.BlockSpec((1, NUM_CLASSES), const),                            # b2
        ],
        out_specs=pl.BlockSpec((batch, NUM_CLASSES), const),
        scratch_shapes=[pltpu.VMEM((1, batch * teach_dim), jnp.float32)],
        compiler_params=pltpu.CompilerParams(
            dimension_semantics=("arbitrary",)),   # sequence-reduction axis
    )(enc2d, teach2d, mask_e, mask_t, w1e, w1t, b1, w2, b2)


def init_params(key):
    """Deterministic init matching nn.Linear's U(-1/sqrt(fan_in), 1/sqrt(fan_in))."""
    k1, k2, k3, k4 = jax.random.split(key, 4)
    in1 = HIDDEN + TEACHER_DIM  # 896
    bound1 = 1.0 / jnp.sqrt(in1)
    bound2 = 1.0 / jnp.sqrt(FC1_OUT)
    return {
        "fc1_w": jax.random.uniform(k1, (FC1_OUT, in1), jnp.float32, -bound1, bound1),
        "fc1_b": jax.random.uniform(k2, (FC1_OUT,), jnp.float32, -bound1, bound1),
        "fc2_w": jax.random.uniform(k3, (NUM_CLASSES, FC1_OUT), jnp.float32, -bound2, bound2),
        "fc2_b": jax.random.uniform(k4, (NUM_CLASSES,), jnp.float32, -bound2, bound2),
    }


if __name__ == "__main__":
    key = jax.random.PRNGKey(0)
    k_p, k_e, k_t, k_d = jax.random.split(key, 4)

    params = init_params(k_p)

    S_enc, S_teach, B = 8, 8, 2
    encoder_outputs = jax.random.normal(k_e, (S_enc, B, HIDDEN), jnp.float32)
    teacher_encoder_outputs = jax.random.normal(k_t, (S_teach, B, TEACHER_DIM), jnp.float32)

    out = average_pre_classify(encoder_outputs, teacher_encoder_outputs, params, k_d)
    out = jax.block_until_ready(out)

    assert out.shape == (B, NUM_CLASSES)
    assert bool(jnp.all(jnp.isfinite(out)))
    print("KERNEL_OK")
</pallas_src>

<mosaic_0001>
module attributes {stable_mosaic.version = 11 : i64} {
  func.func @_avg_pre_classify_kernel(%arg0: i32, %arg1: memref<8x256xf32, #tpu.memory_space<vmem>>, %arg2: memref<8x1536xf32, #tpu.memory_space<vmem>>, %arg3: memref<1x256xf32, #tpu.memory_space<vmem>>, %arg4: memref<1x1536xf32, #tpu.memory_space<vmem>>, %arg5: memref<128x256xf32, #tpu.memory_space<vmem>>, %arg6: memref<768x256xf32, #tpu.memory_space<vmem>>, %arg7: memref<1x256xf32, #tpu.memory_space<vmem>>, %arg8: memref<256x2xf32, #tpu.memory_space<vmem>>, %arg9: memref<1x2xf32, #tpu.memory_space<vmem>>, %arg10: memref<2x2xf32, #tpu.memory_space<vmem>>, %arg11: memref<1x1536xf32, #tpu.memory_space<vmem>>) attributes {dimension_semantics = [#tpu.dimension_semantics<arbitrary>], iteration_bounds = array<i64: 1>, scalar_prefetch = 0 : i64, scratch_operands = 1 : i64, tpu.core_type = #tpu.core_type<tc>, window_params = [{pipeline_mode = #tpu.pipeline_mode<synchronous>, transform_indices = @transform_0, window_bounds = array<i64: 8, 256>}, {transform_indices = @transform_1, window_bounds = array<i64: 8, 1536>}, {pipeline_mode = #tpu.pipeline_mode<synchronous>, transform_indices = @transform_2, window_bounds = array<i64: 1, 256>}, {pipeline_mode = #tpu.pipeline_mode<synchronous>, transform_indices = @transform_3, window_bounds = array<i64: 1, 1536>}, {pipeline_mode = #tpu.pipeline_mode<synchronous>, transform_indices = @transform_4, window_bounds = array<i64: 128, 256>}, {pipeline_mode = #tpu.pipeline_mode<synchronous>, transform_indices = @transform_5, window_bounds = array<i64: 768, 256>}, {pipeline_mode = #tpu.pipeline_mode<synchronous>, transform_indices = @transform_6, window_bounds = array<i64: 1, 256>}, {pipeline_mode = #tpu.pipeline_mode<synchronous>, transform_indices = @transform_7, window_bounds = array<i64: 256, 2>}, {pipeline_mode = #tpu.pipeline_mode<synchronous>, transform_indices = @transform_8, window_bounds = array<i64: 1, 2>}, {pipeline_mode = #tpu.pipeline_mode<synchronous>, transform_indices = @transform_9, window_bounds = array<i64: 2, 2>}]} {
    %c0_i32 = arith.constant 0 : i32
    %0 = arith.cmpi eq, %arg0, %c0_i32 : i32
    %1 = arith.extui %0 : i1 to i32
    %c0_i32_0 = arith.constant 0 : i32
    %2 = arith.cmpi ne, %1, %c0_i32_0 : i32
    scf.if %2 {
      %cst_8 = arith.constant 0.000000e+00 : f32
      %12 = vector.broadcast %cst_8 : f32 to vector<1x1536xf32>
      %c0_9 = arith.constant 0 : index
      %c0_10 = arith.constant 0 : index
      %13 = vector.load %arg11[%c0_9, %c0_10] : memref<1x1536xf32, #tpu.memory_space<vmem>>, vector<1x1536xf32>
      tpu.vector_store %arg11[%c0_9, %c0_10], %12 {strides = array<i32>} : memref<1x1536xf32, #tpu.memory_space<vmem>>, vector<1x1536xf32>,
    } else {
    }
    %c0 = arith.constant 0 : index
    %c0_1 = arith.constant 0 : index
    %3 = vector.load %arg2[%c0, %c0_1] : memref<8x1536xf32, #tpu.memory_space<vmem>>, vector<8x1536xf32>
    %c0_2 = arith.constant 0 : index
    %c0_3 = arith.constant 0 : index
    %4 = vector.load %arg11[%c0_2, %c0_3] : memref<1x1536xf32, #tpu.memory_space<vmem>>, vector<1x1536xf32>
    %cst = arith.constant dense<0.000000e+00> : vector<1536xf32>
    %5 = vector.multi_reduction <add>, %3, %cst [0] : vector<8x1536xf32> to vector<1536xf32>
    %6 = vector.shape_cast %5 : vector<1536xf32> to vector<1x1536xf32>
    %7 = arith.addf %4, %6 : vector<1x1536xf32>
    %c0_4 = arith.constant 0 : index
    %c0_5 = arith.constant 0 : index
    %8 = vector.load %arg11[%c0_4, %c0_5] : memref<1x1536xf32, #tpu.memory_space<vmem>>, vector<1x1536xf32>
    tpu.vector_store %arg11[%c0_4, %c0_5], %7 {strides = array<i32>} : memref<1x1536xf32, #tpu.memory_space<vmem>>, vector<1x1536xf32>,
    %c0_i32_6 = arith.constant 0 : i32
    %9 = arith.cmpi eq, %arg0, %c0_i32_6 : i32
    %10 = arith.extui %9 : i1 to i32
    %c0_i32_7 = arith.constant 0 : i32
    %11 = arith.cmpi ne, %10, %c0_i32_7 : i32
    scf.if %11 {
      %c0_8 = arith.constant 0 : index
      %c0_9 = arith.constant 0 : index
      %12 = vector.load %arg1[%c0_8, %c0_9] : memref<8x256xf32, #tpu.memory_space<vmem>>, vector<8x256xf32>
      %cst_10 = arith.constant dense<0.000000e+00> : vector<256xf32>
      %13 = vector.multi_reduction <add>, %12, %cst_10 [0] : vector<8x256xf32> to vector<256xf32>
      %14 = vector.shape_cast %13 : vector<256xf32> to vector<1x256xf32>
      %cst_11 = arith.constant 1.250000e-01 : f32
      %15 = vector.broadcast %cst_11 : f32 to vector<1x256xf32>
      %16 = arith.mulf %14, %15 : vector<1x256xf32>
      %c0_12 = arith.constant 0 : index
      %c0_13 = arith.constant 0 : index
      %17 = vector.load %arg11[%c0_12, %c0_13] : memref<1x1536xf32, #tpu.memory_space<vmem>>, vector<1x1536xf32>
      %cst_14 = arith.constant 1.250000e-01 : f32
      %18 = vector.broadcast %cst_14 : f32 to vector<1x1536xf32>
      %19 = arith.mulf %17, %18 : vector<1x1536xf32>
      %c0_15 = arith.constant 0 : index
      %c0_16 = arith.constant 0 : index
      %20 = vector.load %arg3[%c0_15, %c0_16] : memref<1x256xf32, #tpu.memory_space<vmem>>, vector<1x256xf32>
      %21 = arith.mulf %16, %20 : vector<1x256xf32>
      %c0_17 = arith.constant 0 : index
      %c0_18 = arith.constant 0 : index
      %22 = vector.load %arg4[%c0_17, %c0_18] : memref<1x1536xf32, #tpu.memory_space<vmem>>, vector<1x1536xf32>
      %23 = arith.mulf %19, %22 : vector<1x1536xf32>
      %c0_19 = arith.constant 0 : index
      %c0_20 = arith.constant 0 : index
      %24 = vector.load %arg5[%c0_19, %c0_20] : memref<128x256xf32, #tpu.memory_space<vmem>>, vector<128x256xf32>
      %c0_21 = arith.constant 0 : index
      %c0_22 = arith.constant 0 : index
      %25 = vector.load %arg6[%c0_21, %c0_22] : memref<768x256xf32, #tpu.memory_space<vmem>>, vector<768x256xf32>
      %c0_23 = arith.constant 0 : index
      %c0_24 = arith.constant 0 : index
      %26 = vector.load %arg7[%c0_23, %c0_24] : memref<1x256xf32, #tpu.memory_space<vmem>>, vector<1x256xf32>
      %c0_25 = arith.constant 0 : index
      %c0_26 = arith.constant 0 : index
      %27 = vector.load %arg8[%c0_25, %c0_26] : memref<256x2xf32, #tpu.memory_space<vmem>>, vector<256x2xf32>
      %c0_27 = arith.constant 0 : index
      %c0_28 = arith.constant 0 : index
      %28 = vector.load %arg9[%c0_27, %c0_28] : memref<1x2xf32, #tpu.memory_space<vmem>>, vector<1x2xf32>
      %29 = vector.extract_strided_slice %21 {offsets = [0, 0], sizes = [1, 128], strides = [1, 1]} : vector<1x256xf32> to vector<1x128xf32>
      %30 = vector.extract_strided_slice %23 {offsets = [0, 0], sizes = [1, 768], strides = [1, 1]} : vector<1x1536xf32> to vector<1x768xf32>
      %cst_29 = arith.constant dense<0.000000e+00> : vector<1x256xf32>
      %31 = tpu.matmul %29, %24, %cst_29 {dimension_numbers = #tpu.dot_dimension_numbers<[1], [0], [0], [1], [0, 0, 1, 1], [], []>} : vector<1x128xf32>, vector<128x256xf32>, vector<1x256xf32> -> vector<1x256xf32>
      %cst_30 = arith.constant dense<0.000000e+00> : vector<1x256xf32>
      %32 = tpu.matmul %30, %25, %cst_30 {dimension_numbers = #tpu.dot_dimension_numbers<[1], [0], [0], [1], [0, 0, 1, 1], [], []>} : vector<1x768xf32>, vector<768x256xf32>, vector<1x256xf32> -> vector<1x256xf32>
      %33 = arith.addf %31, %32 : vector<1x256xf32>
      %34 = arith.addf %33, %26 : vector<1x256xf32>
      %cst_31 = arith.constant 0.000000e+00 : f32
      %35 = vector.broadcast %cst_31 : f32 to vector<1x256xf32>
      %36 = arith.cmpf oge, %34, %35 : vector<1x256xf32>
      %cst_32 = arith.constant 2.000000e-01 : f32
      %37 = vector.broadcast %cst_32 : f32 to vector<1x256xf32>
      %38 = arith.mulf %37, %34 : vector<1x256xf32>
      %39 = arith.select %36, %34, %38 : vector<1x256xi1>, vector<1x256xf32>
      %cst_33 = arith.constant dense<0.000000e+00> : vector<1x2xf32>
      %40 = tpu.matmul %39, %27, %cst_33 {dimension_numbers = #tpu.dot_dimension_numbers<[1], [0], [0], [1], [0, 0, 1, 1], [], []>} : vector<1x256xf32>, vector<256x2xf32>, vector<1x2xf32> -> vector<1x2xf32>
      %41 = arith.addf %40, %28 : vector<1x2xf32>
      %c0_34 = arith.constant 0 : index
      %c0_35 = arith.constant 0 : index
      %42 = vector.load %arg10[%c0_34, %c0_35] : memref<2x2xf32, #tpu.memory_space<vmem>>, vector<1x2xf32>
      tpu.vector_store %arg10[%c0_34, %c0_35], %41 {strides = array<i32>} : memref<2x2xf32, #tpu.memory_space<vmem>>, vector<1x2xf32>,
      %43 = vector.extract_strided_slice %21 {offsets = [0, 128], sizes = [1, 128], strides = [1, 1]} : vector<1x256xf32> to vector<1x128xf32>
      %44 = vector.extract_strided_slice %23 {offsets = [0, 768], sizes = [1, 768], strides = [1, 1]} : vector<1x1536xf32> to vector<1x768xf32>
      %cst_36 = arith.constant dense<0.000000e+00> : vector<1x256xf32>
      %45 = tpu.matmul %43, %24, %cst_36 {dimension_numbers = #tpu.dot_dimension_numbers<[1], [0], [0], [1], [0, 0, 1, 1], [], []>} : vector<1x128xf32>, vector<128x256xf32>, vector<1x256xf32> -> vector<1x256xf32>
      %cst_37 = arith.constant dense<0.000000e+00> : vector<1x256xf32>
      %46 = tpu.matmul %44, %25, %cst_37 {dimension_numbers = #tpu.dot_dimension_numbers<[1], [0], [0], [1], [0, 0, 1, 1], [], []>} : vector<1x768xf32>, vector<768x256xf32>, vector<1x256xf32> -> vector<1x256xf32>
      %47 = arith.addf %45, %46 : vector<1x256xf32>
      %48 = arith.addf %47, %26 : vector<1x256xf32>
      %cst_38 = arith.constant 0.000000e+00 : f32
      %49 = vector.broadcast %cst_38 : f32 to vector<1x256xf32>
      %50 = arith.cmpf oge, %48, %49 : vector<1x256xf32>
      %cst_39 = arith.constant 2.000000e-01 : f32
      %51 = vector.broadcast %cst_39 : f32 to vector<1x256xf32>
      %52 = arith.mulf %51, %48 : vector<1x256xf32>
      %53 = arith.select %50, %48, %52 : vector<1x256xi1>, vector<1x256xf32>
      %cst_40 = arith.constant dense<0.000000e+00> : vector<1x2xf32>
      %54 = tpu.matmul %53, %27, %cst_40 {dimension_numbers = #tpu.dot_dimension_numbers<[1], [0], [0], [1], [0, 0, 1, 1], [], []>} : vector<1x256xf32>, vector<256x2xf32>, vector<1x2xf32> -> vector<1x2xf32>
      %55 = arith.addf %54, %28 : vector<1x2xf32>
      %c1 = arith.constant 1 : index
      %c0_41 = arith.constant 0 : index
      %56 = vector.load %arg10[%c1, %c0_41] : memref<2x2xf32, #tpu.memory_space<vmem>>, vector<1x2xf32>
      tpu.vector_store %arg10[%c1, %c0_41], %55 {strides = array<i32>} : memref<2x2xf32, #tpu.memory_space<vmem>>, vector<1x2xf32>,
    } else {
    }
    return
  }
  func.func @transform_0(%arg0: i32) -> (i32, i32) {
    %c0_i32 = arith.constant 0 : i32
    %c0_i32_0 = arith.constant 0 : i32
    %c0_i32_1 = arith.constant 0 : i32
    return %c0_i32, %c0_i32_0 : i32, i32
  }
  func.func @transform_1(%arg0: i32) -> (i32, i32) {
    %c0_i32 = arith.constant 0 : i32
    %c0_i32_0 = arith.constant 0 : i32
    return %arg0, %c0_i32 : i32, i32
  }
  func.func @transform_2(%arg0: i32) -> (i32, i32) {
    %c0_i32 = arith.constant 0 : i32
    %c0_i32_0 = arith.constant 0 : i32
    %c0_i32_1 = arith.constant 0 : i32
    return %c0_i32, %c0_i32_0 : i32, i32
  }
  func.func @transform_3(%arg0: i32) -> (i32, i32) {
    %c0_i32 = arith.constant 0 : i32
    %c0_i32_0 = arith.constant 0 : i32
    %c0_i32_1 = arith.constant 0 : i32
    return %c0_i32, %c0_i32_0 : i32, i32
  }
  func.func @transform_4(%arg0: i32) -> (i32, i32) {
    %c0_i32 = arith.constant 0 : i32
    %c0_i32_0 = arith.constant 0 : i32
    %c0_i32_1 = arith.constant 0 : i32
    return %c0_i32, %c0_i32_0 : i32, i32
  }
  func.func @transform_5(%arg0: i32) -> (i32, i32) {
    %c0_i32 = arith.constant 0 : i32
    %c0_i32_0 = arith.constant 0 : i32
    %c0_i32_1 = arith.constant 0 : i32
    return %c0_i32, %c0_i32_0 : i32, i32
  }
  func.func @transform_6(%arg0: i32) -> (i32, i32) {
    %c0_i32 = arith.constant 0 : i32
    %c0_i32_0 = arith.constant 0 : i32
    %c0_i32_1 = arith.constant 0 : i32
    return %c0_i32, %c0_i32_0 : i32, i32
  }
  func.func @transform_7(%arg0: i32) -> (i32, i32) {
    %c0_i32 = arith.constant 0 : i32
    %c0_i32_0 = arith.constant 0 : i32
    %c0_i32_1 = arith.constant 0 : i32
    return %c0_i32, %c0_i32_0 : i32, i32
  }
  func.func @transform_8(%arg0: i32) -> (i32, i32) {
    %c0_i32 = arith.constant 0 : i32
    %c0_i32_0 = arith.constant 0 : i32
    %c0_i32_1 = arith.constant 0 : i32
    return %c0_i32, %c0_i32_0 : i32, i32
  }
  func.func @transform_9(%arg0: i32) -> (i32, i32) {
    %c0_i32 = arith.constant 0 : i32
    %c0_i32_0 = arith.constant 0 : i32
    %c0_i32_1 = arith.constant 0 : i32
    return %c0_i32, %c0_i32_0 : i32, i32
  }
}

</mosaic_0001>

<llo_original>
// kernel: average_pre_classify.3
$region0: #{average_pre_classify.3}
  #allocation0 [shape = 'u32[]', space=smem, size = 0x4, offset = 0x4, fixed_abs, tag = 'smem constant byte address 0x4 - core index']
  #allocation1 [shape = 'u32[144,128]{1,0:T(1,128)}', space=vmem, size = 0x12000, scoped, tag = 'internal scratch']
  #allocation2 [shape = 'f32[1,1536]{1,0:T(1,128)}', space=vmem, size = 0x1800, scoped, tag = 'scratch operand']
  %s0 = inlined_call_operand.vmem [shape: f32[8,256], index: 0, kind: input, shape index: {}]
  %s1 = inlined_call_operand.vmem [shape: f32[8,1536], index: 1, kind: input, shape index: {}]
  %s2 = inlined_call_operand.vmem [shape: f32[1,256], index: 2, kind: input, shape index: {}]
  %s3 = inlined_call_operand.vmem [shape: f32[1,1536], index: 3, kind: input, shape index: {}]
  %s4 = inlined_call_operand.vmem [shape: f32[128,256], index: 4, kind: input, shape index: {}]
  %s5 = inlined_call_operand.vmem [shape: f32[768,256], index: 5, kind: input, shape index: {}]
  %s6 = inlined_call_operand.vmem [shape: f32[1,256], index: 6, kind: input, shape index: {}]
  %s7 = inlined_call_operand.vmem [shape: f32[256,2], index: 7, kind: input, shape index: {}]
  %s8 = inlined_call_operand.vmem [shape: f32[1,2], index: 8, kind: input, shape index: {}]
  %s9 = inlined_call_operand.hbm [shape: f32[2,2], index: 9, kind: output, shape index: {}]
  %s10 = sld [smem:[#allocation0]]
  $region54: #{average_pre_classify.3} parent=0
    _
  %s12 = ssub.s32 1, %s10
  %s13 = scalar_select 0, %s12, %s10
  $region1: #{average_pre_classify.3} parent=0
    #allocation3 [shape = 'u8[1024]{0}', space=vmem, size = 0x400, scoped, tag = 'output window, operand 0, single buffered']
    #allocation4 [shape = 's32[1]{0}', space=sflag, size = 0x4, scoped, tag = 'scoped memory for average_pre_classify.3']
    %14 = vsyncpa [#allocation4], 0
    // Predicated region
    $region2: #{average_pre_classify.3} parent=1 // pred_check
      _
    $region3: #{average_pre_classify.3} parent=1 // pred_check_branch
      %16 = sbr.rel (0) target = $region5
    $region4: #{average_pre_classify.3} parent=1 // pred_region
      _
    $region5: #{average_pre_classify.3} parent=1 // pred_fallthru
      _
    // Predicated region
    $region6: #{average_pre_classify.3} parent=1 // pred_check
      _
    $region7: #{average_pre_classify.3} parent=1 // pred_check_branch
      %18 = sbr.rel (0) target = $region9
    $region8: #{average_pre_classify.3} parent=1 // pred_region
      _
    $region9: #{average_pre_classify.3} parent=1 // pred_fallthru
      _
    // Predicated region
    $region10: #{average_pre_classify.3} parent=1 // pred_check
      _
    $region11: #{average_pre_classify.3} parent=1 // pred_check_branch
      %20 = sbr.rel (0) target = $region13
    $region12: #{average_pre_classify.3} parent=1 // pred_region
      _
    $region13: #{average_pre_classify.3} parent=1 // pred_fallthru
      _
    // Predicated region
    $region14: #{average_pre_classify.3} parent=1 // pred_check
      _
    $region15: #{average_pre_classify.3} parent=1 // pred_check_branch
      %22 = sbr.rel (0) target = $region17
    $region16: #{average_pre_classify.3} parent=1 // pred_region
      _
    $region17: #{average_pre_classify.3} parent=1 // pred_fallthru
      _
    // Predicated region
    $region18: #{average_pre_classify.3} parent=1 // pred_check
      _
    $region19: #{average_pre_classify.3} parent=1 // pred_check_branch
      %24 = sbr.rel (0) target = $region21
    $region20: #{average_pre_classify.3} parent=1 // pred_region
      _
    $region21: #{average_pre_classify.3} parent=1 // pred_fallthru
      _
    // Predicated region
    $region22: #{average_pre_classify.3} parent=1 // pred_check
      _
    $region23: #{average_pre_classify.3} parent=1 // pred_check_branch
      %26 = sbr.rel (0) target = $region25
    $region24: #{average_pre_classify.3} parent=1 // pred_region
      _
    $region25: #{average_pre_classify.3} parent=1 // pred_fallthru
      _
    // Predicated region
    $region26: #{average_pre_classify.3} parent=1 // pred_check
      _
    $region27: #{average_pre_classify.3} parent=1 // pred_check_branch
      %28 = sbr.rel (0) target = $region29
    $region28: #{average_pre_classify.3} parent=1 // pred_region
      _
    $region29: #{average_pre_classify.3} parent=1 // pred_fallthru
      _
    // Predicated region
    $region30: #{average_pre_classify.3} parent=1 // pred_check
      _
    $region31: #{average_pre_classify.3} parent=1 // pred_check_branch
      %30 = sbr.rel (0) target = $region33
    $region32: #{average_pre_classify.3} parent=1 // pred_region
      _
    $region33: #{average_pre_classify.3} parent=1 // pred_fallthru
      _
    // Predicated region
    $region34: #{average_pre_classify.3} parent=1 // pred_check
      _
    $region35: #{average_pre_classify.3} parent=1 // pred_check_branch
      %32 = sbr.rel (0) target = $region37
    $region36: #{average_pre_classify.3} parent=1 // pred_region
      _
    $region37: #{average_pre_classify.3} parent=1 // pred_fallthru
      _
    %p33 = scmp.eq.s32.totalorder 0, 0
    // Predicated region
    $region38: #{average_pre_classify.3} parent=1 // pred_check
      %p34 = pneg %p33
    $region39: #{average_pre_classify.3} parent=1 // pred_check_branch
      %36 = sbr.rel (%p34) target = $region41
    $region40: #{average_pre_classify.3} parent=1 // pred_region
      %37 = vst [vmem:[#allocation2] sm:$0xff] 0.0
      %v38 = vlaneseq
      %vm39 = vcmp.ge.s32.totalorder %v38, 0
      %vm40 = vcmp.lt.s32.totalorder %v38, 512
      %vm41 = vmand %vm39, %vm40
      %42 = vst.msk [vmem:[#allocation2 + $0x8] sm:$0xf] %vm41, 0.0
    $region41: #{average_pre_classify.3} parent=1 // pred_fallthru
      _
    %v43 = vld [vmem:[%s1] sm:$0xff]
    %v44 = vld [vmem:[%s1 + $0x8] sm:$0xff]
    %v45 = vld [vmem:[%s1 + $0x10] sm:$0xff]
    %v46 = vld [vmem:[%s1 + $0x18] sm:$0xff]
    %v47 = vld [vmem:[%s1 + $0x20] sm:$0xff]
    %v48 = vld [vmem:[%s1 + $0x28] sm:$0xff]
    %v49 = vld [vmem:[%s1 + $0x30] sm:$0xff]
    %v50 = vld [vmem:[%s1 + $0x38] sm:$0xff]
    %v51 = vld [vmem:[%s1 + $0x40] sm:$0xff]
    %v52 = vld [vmem:[%s1 + $0x48] sm:$0xff]
    %v53 = vld [vmem:[%s1 + $0x50] sm:$0xff]
    %v54 = vld [vmem:[%s1 + $0x58] sm:$0xff]
    %v55 = vld [vmem:[#allocation2] sm:$0xff]
    %v56 = vld [vmem:[#allocation2 + $0x8] sm:$0xf]
    %v57 = vrot.slane %v43, 4
    %v58 = vadd.f32 %v43, %v57
    %v59 = vrot.slane %v58, 2
    %v60 = vadd.f32 %v58, %v59
    %v61 = vrot.slane %v60, 1
    %v62 = vadd.f32 %v60, %v61
    %v63 = vrot.slane %v44, 4
    %v64 = vadd.f32 %v44, %v63
    %v65 = vrot.slane %v64, 2
    %v66 = vadd.f32 %v64, %v65
    %v67 = vrot.slane %v66, 1
    %v68 = vadd.f32 %v66, %v67
    %v69 = vrot.slane %v45, 4
    %v70 = vadd.f32 %v45, %v69
    %v71 = vrot.slane %v70, 2
    %v72 = vadd.f32 %v70, %v71
    %v73 = vrot.slane %v72, 1
    %v74 = vadd.f32 %v72, %v73
    %v75 = vrot.slane %v46, 4
    %v76 = vadd.f32 %v46, %v75
    %v77 = vrot.slane %v76, 2
    %v78 = vadd.f32 %v76, %v77
    %v79 = vrot.slane %v78, 1
    %v80 = vadd.f32 %v78, %v79
    %v81 = vrot.slane %v47, 4
    %v82 = vadd.f32 %v47, %v81
    %v83 = vrot.slane %v82, 2
    %v84 = vadd.f32 %v82, %v83
    %v85 = vrot.slane %v84, 1
    %v86 = vadd.f32 %v84, %v85
    %v87 = vrot.slane %v48, 4
    %v88 = vadd.f32 %v48, %v87
    %v89 = vrot.slane %v88, 2
    %v90 = vadd.f32 %v88, %v89
    %v91 = vrot.slane %v90, 1
    %v92 = vadd.f32 %v90, %v91
    %v93 = vrot.slane %v49, 4
    %v94 = vadd.f32 %v49, %v93
    %v95 = vrot.slane %v94, 2
    %v96 = vadd.f32 %v94, %v95
    %v97 = vrot.slane %v96, 1
    %v98 = vadd.f32 %v96, %v97
    %v99 = vrot.slane %v50, 4
    %v100 = vadd.f32 %v50, %v99
    %v101 = vrot.slane %v100, 2
    %v102 = vadd.f32 %v100, %v101
    %v103 = vrot.slane %v102, 1
    %v104 = vadd.f32 %v102, %v103
    %v105 = vrot.slane %v51, 4
    %v106 = vadd.f32 %v51, %v105
    %v107 = vrot.slane %v106, 2
    %v108 = vadd.f32 %v106, %v107
    %v109 = vrot.slane %v108, 1
    %v110 = vadd.f32 %v108, %v109
    %v111 = vrot.slane %v52, 4
    %v112 = vadd.f32 %v52, %v111
    %v113 = vrot.slane %v112, 2
    %v114 = vadd.f32 %v112, %v113
    %v115 = vrot.slane %v114, 1
    %v116 = vadd.f32 %v114, %v115
    %v117 = vrot.slane %v53, 4
    %v118 = vadd.f32 %v53, %v117
    %v119 = vrot.slane %v118, 2
    %v120 = vadd.f32 %v118, %v119
    %v121 = vrot.slane %v120, 1
    %v122 = vadd.f32 %v120, %v121
    %v123 = vrot.slane %v54, 4
    %v124 = vadd.f32 %v54, %v123
    %v125 = vrot.slane %v124, 2
    %v126 = vadd.f32 %v124, %v125
    %v127 = vrot.slane %v126, 1
    %v128 = vadd.f32 %v126, %v127
    %v141 = vcombine.low %v62, %v68
    %v142 = vcombine.low %v74, %v80
    %v143 = vcombine.low %v86, %v92
    %v144 = vcombine.low %v98, %v104
    %v146 = vunpack.c.l.s4 1966171168
    %v147 = vunpack.c.0.s8 %v146
    %v148 = vlaneseq
    %v149 = vshrl.u32 %v148, 7
    %v150 = vsub.s32 %v147, %v149
    %v151 = vrot.slane %v141, %v150
    %v153 = vunpack.c.l.s4 1966171168
    %v154 = vunpack.c.0.s8 %v153
    %v155 = vlaneseq
    %v156 = vshrl.u32 %v155, 7
    %v157 = vsub.s32 %v154, %v156
    %v158 = vrot.slane %v142, %v157
    %v160 = vunpack.c.l.s4 1966171168
    %v161 = vunpack.c.0.s8 %v160
    %v162 = vlaneseq
    %v163 = vshrl.u32 %v162, 7
    %v164 = vsub.s32 %v161, %v163
    %v165 = vrot.slane %v143, %v164
    %v167 = vunpack.c.l.s4 1966171168
    %v168 = vunpack.c.0.s8 %v167
    %v169 = vlaneseq
    %v170 = vshrl.u32 %v169, 7
    %v171 = vsub.s32 %v168, %v170
    %v172 = vrot.slane %v144, %v171
    %v173 = vcombine.low %v151, %v158
    %v174 = vcombine.low %v165, %v172
    %v176 = vunpack.c.l.s4 1966171168
    %v177 = vunpack.c.0.s8 %v176
    %v178 = vlaneseq
    %v179 = vshrl.u32 %v178, 7
    %v180 = vsub.s32 %v177, %v179
    %v181 = vrot.slane %v173, %v180
    %v183 = vunpack.c.l.s4 1966171168
    %v184 = vunpack.c.0.s8 %v183
    %v185 = vlaneseq
    %v186 = vshrl.u32 %v185, 7
    %v187 = vsub.s32 %v184, %v186
    %v188 = vrot.slane %v174, %v187
    %v189 = vcombine.low %v181, %v188
    %v190 = vcombine.low %v110, %v116
    %v191 = vcombine.low %v122, %v128
    %v193 = vunpack.c.l.s4 1966171168
    %v194 = vunpack.c.0.s8 %v193
    %v195 = vlaneseq
    %v196 = vshrl.u32 %v195, 7
    %v197 = vsub.s32 %v194, %v196
    %v198 = vrot.slane %v190, %v197
    %v200 = vunpack.c.l.s4 1966171168
    %v201 = vunpack.c.0.s8 %v200
    %v202 = vlaneseq
    %v203 = vshrl.u32 %v202, 7
    %v204 = vsub.s32 %v201, %v203
    %v205 = vrot.slane %v191, %v204
    %v206 = vcombine.low %v198, %v205
    %v208 = vunpack.c.l.s4 1966171168
    %v209 = vunpack.c.0.s8 %v208
    %v210 = vlaneseq
    %v211 = vshrl.u32 %v210, 7
    %v212 = vsub.s32 %v209, %v211
    %v213 = vrot.slane %v206, %v212
    %v216 = vadd.f32 %v55, %v189
    %v217 = vadd.f32 %v56, %v213
    %218 = vst [vmem:[#allocation2] sm:$0xff] %v216
    %v219 = vlaneseq
    %vm220 = vcmp.ge.s32.totalorder %v219, 0
    %vm221 = vcmp.lt.s32.totalorder %v219, 512
    %vm222 = vmand %vm220, %vm221
    %223 = vst.msk [vmem:[#allocation2 + $0x8] sm:$0xf] %vm222, %v217
    // Predicated region
    $region42: #{average_pre_classify.3} parent=1 // pred_check
      %p224 = pneg %p33
    $region43: #{average_pre_classify.3} parent=1 // pred_check_branch
      %226 = sbr.rel (%p224) target = $region45
    $region44: #{average_pre_classify.3} parent=1 // pred_region
      %v227 = vld [vmem:[%s0] sm:$0xff]
      %v228 = vld [vmem:[%s0 + $0x8] sm:$0xff]
      %v229 = vrot.slane %v227, 4
      %v230 = vadd.f32 %v227, %v229
      %v231 = vrot.slane %v230, 2
      %v232 = vadd.f32 %v230, %v231
      %v233 = vrot.slane %v232, 1
      %v234 = vadd.f32 %v232, %v233
      %v235 = vrot.slane %v228, 4
      %v236 = vadd.f32 %v228, %v235
      %v237 = vrot.slane %v236, 2
      %v238 = vadd.f32 %v236, %v237
      %v239 = vrot.slane %v238, 1
      %v240 = vadd.f32 %v238, %v239
      %v241 = vmul.f32 %v234, 0.125
      %v242 = vmul.f32 %v240, 0.125
      %v243 = vld [vmem:[#allocation2] sm:$0xff]
      %v244 = vld [vmem:[#allocation2 + $0x8] sm:$0xf]
      %v245 = vmul.f32 %v243, 0.125
      %v246 = vmul.f32 %v244, 0.125
      %v247 = vld [vmem:[%s2] sm:$0x3]
      %v249 = vlaneseq
      %v250 = vshrl.u32 %v249, 7
      %v251 = vsub.s32 0, %v250
      %v252 = vrot.slane %v247, %v251
      %v253 = vlaneseq
      %v254 = vshrl.u32 %v253, 7
      %v255 = vsub.s32 1, %v254
      %v256 = vrot.slane %v247, %v255
      %v259 = vmul.f32 %v241, %v252
      %v260 = vmul.f32 %v242, %v256
      %v261 = vld [vmem:[%s3] sm:$0xff]
      %v262 = vld [vmem:[%s3 + $0x8] sm:$0xf]
      %v263 = vmul.f32 %v245, %v261
      %v264 = vmul.f32 %v246, %v262
      %v265 = vld [vmem:[%s4] sm:$0xff]
      %v266 = vld [vmem:[%s4 + $0x8] sm:$0xff]
      %v267 = vld [vmem:[%s4 + $0x10] sm:$0xff]
      %v268 = vld [vmem:[%s4 + $0x18] sm:$0xff]
      %v269 = vld [vmem:[%s4 + $0x20] sm:$0xff]
      %v270 = vld [vmem:[%s4 + $0x28] sm:$0xff]
      %v271 = vld [vmem:[%s4 + $0x30] sm:$0xff]
      %v272 = vld [vmem:[%s4 + $0x38] sm:$0xff]
      %v273 = vld [vmem:[%s4 + $0x40] sm:$0xff]
      %v274 = vld [vmem:[%s4 + $0x48] sm:$0xff]
      %v275 = vld [vmem:[%s4 + $0x50] sm:$0xff]
      %v276 = vld [vmem:[%s4 + $0x58] sm:$0xff]
      %v277 = vld [vmem:[%s4 + $0x60] sm:$0xff]
      %v278 = vld [vmem:[%s4 + $0x68] sm:$0xff]
      %v279 = vld [vmem:[%s4 + $0x70] sm:$0xff]
      %v280 = vld [vmem:[%s4 + $0x78] sm:$0xff]
      %v281 = vld [vmem:[%s4 + $0x80] sm:$0xff]
      %v282 = vld [vmem:[%s4 + $0x88] sm:$0xff]
      %v283 = vld [vmem:[%s4 + $0x90] sm:$0xff]
      %v284 = vld [vmem:[%s4 + $0x98] sm:$0xff]
      %v285 = vld [vmem:[%s4 + $0xa0] sm:$0xff]
      %v286 = vld [vmem:[%s4 + $0xa8] sm:$0xff]
      %v287 = vld [vmem:[%s4 + $0xb0] sm:$0xff]
      %v288 = vld [vmem:[%s4 + $0xb8] sm:$0xff]
      %v289 = vld [vmem:[%s4 + $0xc0] sm:$0xff]
      %v290 = vld [vmem:[%s4 + $0xc8] sm:$0xff]
      %v291 = vld [vmem:[%s4 + $0xd0] sm:$0xff]
      %v292 = vld [vmem:[%s4 + $0xd8] sm:$0xff]
      %v293 = vld [vmem:[%s4 + $0xe0] sm:$0xff]
      %v294 = vld [vmem:[%s4 + $0xe8] sm:$0xff]
      %v295 = vld [vmem:[%s4 + $0xf0] sm:$0xff]
      %v296 = vld [vmem:[%s4 + $0xf8] sm:$0xff]
      %v297 = vld [vmem:[%s5] sm:$0xff]
      %v298 = vld [vmem:[%s5 + $0x8] sm:$0xff]
      %v299 = vld [vmem:[%s5 + $0x10] sm:$0xff]
      %v300 = vld [vmem:[%s5 + $0x18] sm:$0xff]
      %v301 = vld [vmem:[%s5 + $0x20] sm:$0xff]
      %v302 = vld [vmem:[%s5 + $0x28] sm:$0xff]
      %v303 = vld [vmem:[%s5 + $0x30] sm:$0xff]
      %v304 = vld [vmem:[%s5 + $0x38] sm:$0xff]
      %v305 = vld [vmem:[%s5 + $0x40] sm:$0xff]
      %v306 = vld [vmem:[%s5 + $0x48] sm:$0xff]
      %v307 = vld [vmem:[%s5 + $0x50] sm:$0xff]
      %v308 = vld [vmem:[%s5 + $0x58] sm:$0xff]
      %v309 = vld [vmem:[%s5 + $0x60] sm:$0xff]
      %v310 = vld [vmem:[%s5 + $0x68] sm:$0xff]
      %v311 = vld [vmem:[%s5 + $0x70] sm:$0xff]
      %v312 = vld [vmem:[%s5 + $0x78] sm:$0xff]
      %v313 = vld [vmem:[%s5 + $0x80] sm:$0xff]
      %v314 = vld [vmem:[%s5 + $0x88] sm:$0xff]
      %v315 = vld [vmem:[%s5 + $0x90] sm:$0xff]
      %v316 = vld [vmem:[%s5 + $0x98] sm:$0xff]
      %v317 = vld [vmem:[%s5 + $0xa0] sm:$0xff]
      %v318 = vld [vmem:[%s5 + $0xa8] sm:$0xff]
      %v319 = vld [vmem:[%s5 + $0xb0] sm:$0xff]
      %v320 = vld [vmem:[%s5 + $0xb8] sm:$0xff]
      %v321 = vld [vmem:[%s5 + $0xc0] sm:$0xff]
      %v322 = vld [vmem:[%s5 + $0xc8] sm:$0xff]
      %v323 = vld [vmem:[%s5 + $0xd0] sm:$0xff]
      %v324 = vld [vmem:[%s5 + $0xd8] sm:$0xff]
      %v325 = vld [vmem:[%s5 + $0xe0] sm:$0xff]
      %v326 = vld [vmem:[%s5 + $0xe8] sm:$0xff]
      %v327 = vld [vmem:[%s5 + $0xf0] sm:$0xff]
      %v328 = vld [vmem:[%s5 + $0xf8] sm:$0xff]
      %v329 = vld [vmem:[%s5 + $0x100] sm:$0xff]
      %v330 = vld [vmem:[%s5 + $0x108] sm:$0xff]
      %v331 = vld [vmem:[%s5 + $0x110] sm:$0xff]
      %v332 = vld [vmem:[%s5 + $0x118] sm:$0xff]
      %v333 = vld [vmem:[%s5 + $0x120] sm:$0xff]
      %v334 = vld [vmem:[%s5 + $0x128] sm:$0xff]
      %v335 = vld [vmem:[%s5 + $0x130] sm:$0xff]
      %v336 = vld [vmem:[%s5 + $0x138] sm:$0xff]
      %v337 = vld [vmem:[%s5 + $0x140] sm:$0xff]
      %v338 = vld [vmem:[%s5 + $0x148] sm:$0xff]
      %v339 = vld [vmem:[%s5 + $0x150] sm:$0xff]
      %v340 = vld [vmem:[%s5 + $0x158] sm:$0xff]
      %v341 = vld [vmem:[%s5 + $0x160] sm:$0xff]
      %v342 = vld [vmem:[%s5 + $0x168] sm:$0xff]
      %v343 = vld [vmem:[%s5 + $0x170] sm:$0xff]
      %v344 = vld [vmem:[%s5 + $0x178] sm:$0xff]
      %v345 = vld [vmem:[%s5 + $0x180] sm:$0xff]
      %v346 = vld [vmem:[%s5 + $0x188] sm:$0xff]
      %v347 = vld [vmem:[%s5 + $0x190] sm:$0xff]
      %v348 = vld [vmem:[%s5 + $0x198] sm:$0xff]
      %v349 = vld [vmem:[%s5 + $0x1a0] sm:$0xff]
      %v350 = vld [vmem:[%s5 + $0x1a8] sm:$0xff]
      %v351 = vld [vmem:[%s5 + $0x1b0] sm:$0xff]
      %v352 = vld [vmem:[%s5 + $0x1b8] sm:$0xff]
      %v353 = vld [vmem:[%s5 + $0x1c0] sm:$0xff]
      %v354 = vld [vmem:[%s5 + $0x1c8] sm:$0xff]
      %v355 = vld [vmem:[%s5 + $0x1d0] sm:$0xff]
      %v356 = vld [vmem:[%s5 + $0x1d8] sm:$0xff]
      %v357 = vld [vmem:[%s5 + $0x1e0] sm:$0xff]
      %v358 = vld [vmem:[%s5 + $0x1e8] sm:$0xff]
      %v359 = vld [vmem:[%s5 + $0x1f0] sm:$0xff]
      %v360 = vld [vmem:[%s5 + $0x1f8] sm:$0xff]
      %v361 = vld [vmem:[%s5 + $0x200] sm:$0xff]
      %v362 = vld [vmem:[%s5 + $0x208] sm:$0xff]
      %v363 = vld [vmem:[%s5 + $0x210] sm:$0xff]
      %v364 = vld [vmem:[%s5 + $0x218] sm:$0xff]
      %v365 = vld [vmem:[%s5 + $0x220] sm:$0xff]
      %v366 = vld [vmem:[%s5 + $0x228] sm:$0xff]
      %v367 = vld [vmem:[%s5 + $0x230] sm:$0xff]
      %v368 = vld [vmem:[%s5 + $0x238] sm:$0xff]
      %v369 = vld [vmem:[%s5 + $0x240] sm:$0xff]
      %v370 = vld [vmem:[%s5 + $0x248] sm:$0xff]
      %v371 = vld [vmem:[%s5 + $0x250] sm:$0xff]
      %v372 = vld [vmem:[%s5 + $0x258] sm:$0xff]
      %v373 = vld [vmem:[%s5 + $0x260] sm:$0xff]
      %v374 = vld [vmem:[%s5 + $0x268] sm:$0xff]
      %v375 = vld [vmem:[%s5 + $0x270] sm:$0xff]
      %v376 = vld [vmem:[%s5 + $0x278] sm:$0xff]
      %v377 = vld [vmem:[%s5 + $0x280] sm:$0xff]
      %v378 = vld [vmem:[%s5 + $0x288] sm:$0xff]
      %v379 = vld [vmem:[%s5 + $0x290] sm:$0xff]
      %v380 = vld [vmem:[%s5 + $0x298] sm:$0xff]
      %v381 = vld [vmem:[%s5 + $0x2a0] sm:$0xff]
      %v382 = vld [vmem:[%s5 + $0x2a8] sm:$0xff]
      %v383 = vld [vmem:[%s5 + $0x2b0] sm:$0xff]
      %v384 = vld [vmem:[%s5 + $0x2b8] sm:$0xff]
      %v385 = vld [vmem:[%s5 + $0x2c0] sm:$0xff]
      %v386 = vld [vmem:[%s5 + $0x2c8] sm:$0xff]
      %v387 = vld [vmem:[%s5 + $0x2d0] sm:$0xff]
      %v388 = vld [vmem:[%s5 + $0x2d8] sm:$0xff]
      %v389 = vld [vmem:[%s5 + $0x2e0] sm:$0xff]
      %v390 = vld [vmem:[%s5 + $0x2e8] sm:$0xff]
      %v391 = vld [vmem:[%s5 + $0x2f0] sm:$0xff]
      %v392 = vld [vmem:[%s5 + $0x2f8] sm:$0xff]
      %v393 = vld [vmem:[%s5 + $0x300] sm:$0xff]
      %v394 = vld [vmem:[%s5 + $0x308] sm:$0xff]
      %v395 = vld [vmem:[%s5 + $0x310] sm:$0xff]
      %v396 = vld [vmem:[%s5 + $0x318] sm:$0xff]
      %v397 = vld [vmem:[%s5 + $0x320] sm:$0xff]
      %v398 = vld [vmem:[%s5 + $0x328] sm:$0xff]
      %v399 = vld [vmem:[%s5 + $0x330] sm:$0xff]
      %v400 = vld [vmem:[%s5 + $0x338] sm:$0xff]
      %v401 = vld [vmem:[%s5 + $0x340] sm:$0xff]
      %v402 = vld [vmem:[%s5 + $0x348] sm:$0xff]
      %v403 = vld [vmem:[%s5 + $0x350] sm:$0xff]
      %v404 = vld [vmem:[%s5 + $0x358] sm:$0xff]
      %v405 = vld [vmem:[%s5 + $0x360] sm:$0xff]
      %v406 = vld [vmem:[%s5 + $0x368] sm:$0xff]
      %v407 = vld [vmem:[%s5 + $0x370] sm:$0xff]
      %v408 = vld [vmem:[%s5 + $0x378] sm:$0xff]
      %v409 = vld [vmem:[%s5 + $0x380] sm:$0xff]
      %v410 = vld [vmem:[%s5 + $0x388] sm:$0xff]
      %v411 = vld [vmem:[%s5 + $0x390] sm:$0xff]
      %v412 = vld [vmem:[%s5 + $0x398] sm:$0xff]
      %v413 = vld [vmem:[%s5 + $0x3a0] sm:$0xff]
      %v414 = vld [vmem:[%s5 + $0x3a8] sm:$0xff]
      %v415 = vld [vmem:[%s5 + $0x3b0] sm:$0xff]
      %v416 = vld [vmem:[%s5 + $0x3b8] sm:$0xff]
      %v417 = vld [vmem:[%s5 + $0x3c0] sm:$0xff]
      %v418 = vld [vmem:[%s5 + $0x3c8] sm:$0xff]
      %v419 = vld [vmem:[%s5 + $0x3d0] sm:$0xff]
      %v420 = vld [vmem:[%s5 + $0x3d8] sm:$0xff]
      %v421 = vld [vmem:[%s5 + $0x3e0] sm:$0xff]
      %v422 = vld [vmem:[%s5 + $0x3e8] sm:$0xff]
      %v423 = vld [vmem:[%s5 + $0x3f0] sm:$0xff]
      %v424 = vld [vmem:[%s5 + $0x3f8] sm:$0xff]
      %v425 = vld [vmem:[%s5 + $0x400] sm:$0xff]
      %v426 = vld [vmem:[%s5 + $0x408] sm:$0xff]
      %v427 = vld [vmem:[%s5 + $0x410] sm:$0xff]
      %v428 = vld [vmem:[%s5 + $0x418] sm:$0xff]
      %v429 = vld [vmem:[%s5 + $0x420] sm:$0xff]
      %v430 = vld [vmem:[%s5 + $0x428] sm:$0xff]
      %v431 = vld [vmem:[%s5 + $0x430] sm:$0xff]
      %v432 = vld [vmem:[%s5 + $0x438] sm:$0xff]
      %v433 = vld [vmem:[%s5 + $0x440] sm:$0xff]
      %v434 = vld [vmem:[%s5 + $0x448] sm:$0xff]
      %v435 = vld [vmem:[%s5 + $0x450] sm:$0xff]
      %v436 = vld [vmem:[%s5 + $0x458] sm:$0xff]
      %v437 = vld [vmem:[%s5 + $0x460] sm:$0xff]
      %v438 = vld [vmem:[%s5 + $0x468] sm:$0xff]
      %v439 = vld [vmem:[%s5 + $0x470] sm:$0xff]
      %v440 = vld [vmem:[%s5 + $0x478] sm:$0xff]
      %v441 = vld [vmem:[%s5 + $0x480] sm:$0xff]
      %v442 = vld [vmem:[%s5 + $0x488] sm:$0xff]
      %v443 = vld [vmem:[%s5 + $0x490] sm:$0xff]
      %v444 = vld [vmem:[%s5 + $0x498] sm:$0xff]
      %v445 = vld [vmem:[%s5 + $0x4a0] sm:$0xff]
      %v446 = vld [vmem:[%s5 + $0x4a8] sm:$0xff]
      %v447 = vld [vmem:[%s5 + $0x4b0] sm:$0xff]
      %v448 = vld [vmem:[%s5 + $0x4b8] sm:$0xff]
      %v449 = vld [vmem:[%s5 + $0x4c0] sm:$0xff]
      %v450 = vld [vmem:[%s5 + $0x4c8] sm:$0xff]
      %v451 = vld [vmem:[%s5 + $0x4d0] sm:$0xff]
      %v452 = vld [vmem:[%s5 + $0x4d8] sm:$0xff]
      %v453 = vld [vmem:[%s5 + $0x4e0] sm:$0xff]
      %v454 = vld [vmem:[%s5 + $0x4e8] sm:$0xff]
      %v455 = vld [vmem:[%s5 + $0x4f0] sm:$0xff]
      %v456 = vld [vmem:[%s5 + $0x4f8] sm:$0xff]
      %v457 = vld [vmem:[%s5 + $0x500] sm:$0xff]
      %v458 = vld [vmem:[%s5 + $0x508] sm:$0xff]
      %v459 = vld [vmem:[%s5 + $0x510] sm:$0xff]
      %v460 = vld [vmem:[%s5 + $0x518] sm:$0xff]
      %v461 = vld [vmem:[%s5 + $0x520] sm:$0xff]
      %v462 = vld [vmem:[%s5 + $0x528] sm:$0xff]
      %v463 = vld [vmem:[%s5 + $0x530] sm:$0xff]
      %v464 = vld [vmem:[%s5 + $0x538] sm:$0xff]
      %v465 = vld [vmem:[%s5 + $0x540] sm:$0xff]
      %v466 = vld [vmem:[%s5 + $0x548] sm:$0xff]
      %v467 = vld [vmem:[%s5 + $0x550] sm:$0xff]
      %v468 = vld [vmem:[%s5 + $0x558] sm:$0xff]
      %v469 = vld [vmem:[%s5 + $0x560] sm:$0xff]
      %v470 = vld [vmem:[%s5 + $0x568] sm:$0xff]
      %v471 = vld [vmem:[%s5 + $0x570] sm:$0xff]
      %v472 = vld [vmem:[%s5 + $0x578] sm:$0xff]
      %v473 = vld [vmem:[%s5 + $0x580] sm:$0xff]
      %v474 = vld [vmem:[%s5 + $0x588] sm:$0xff]
      %v475 = vld [vmem:[%s5 + $0x590] sm:$0xff]
      %v476 = vld [vmem:[%s5 + $0x598] sm:$0xff]
      %v477 = vld [vmem:[%s5 + $0x5a0] sm:$0xff]
      %v478 = vld [vmem:[%s5 + $0x5a8] sm:$0xff]
      %v479 = vld [vmem:[%s5 + $0x5b0] sm:$0xff]
      %v480 = vld [vmem:[%s5 + $0x5b8] sm:$0xff]
      %v481 = vld [vmem:[%s5 + $0x5c0] sm:$0xff]
      %v482 = vld [vmem:[%s5 + $0x5c8] sm:$0xff]
      %v483 = vld [vmem:[%s5 + $0x5d0] sm:$0xff]
      %v484 = vld [vmem:[%s5 + $0x5d8] sm:$0xff]
      %v485 = vld [vmem:[%s5 + $0x5e0] sm:$0xff]
      %v486 = vld [vmem:[%s5 + $0x5e8] sm:$0xff]
      %v487 = vld [vmem:[%s5 + $0x5f0] sm:$0xff]
      %v488 = vld [vmem:[%s5 + $0x5f8] sm:$0xff]
      %v489 = vld [vmem:[%s6] sm:$0x3]
      %v490 = vld [vmem:[%s7] sm:$0xff]
      %v491 = vld [vmem:[%s7 + $0x8] sm:$0xff]
      %v492 = vld [vmem:[%s7 + $0x10] sm:$0xff]
      %v493 = vld [vmem:[%s7 + $0x18] sm:$0xff]
      %v494 = vld [vmem:[%s7 + $0x20] sm:$0xff]
      %v495 = vld [vmem:[%s7 + $0x28] sm:$0xff]
      %v496 = vld [vmem:[%s7 + $0x30] sm:$0xff]
      %v497 = vld [vmem:[%s7 + $0x38] sm:$0xff]
      %v498 = vld [vmem:[%s7 + $0x40] sm:$0xff]
      %v499 = vld [vmem:[%s7 + $0x48] sm:$0xff]
      %v500 = vld [vmem:[%s7 + $0x50] sm:$0xff]
      %v501 = vld [vmem:[%s7 + $0x58] sm:$0xff]
      %v502 = vld [vmem:[%s7 + $0x60] sm:$0xff]
      %v503 = vld [vmem:[%s7 + $0x68] sm:$0xff]
      %v504 = vld [vmem:[%s7 + $0x70] sm:$0xff]
      %v505 = vld [vmem:[%s7 + $0x78] sm:$0xff]
      %v506 = vld [vmem:[%s7 + $0x80] sm:$0xff]
      %v507 = vld [vmem:[%s7 + $0x88] sm:$0xff]
      %v508 = vld [vmem:[%s7 + $0x90] sm:$0xff]
      %v509 = vld [vmem:[%s7 + $0x98] sm:$0xff]
      %v510 = vld [vmem:[%s7 + $0xa0] sm:$0xff]
      %v511 = vld [vmem:[%s7 + $0xa8] sm:$0xff]
      %v512 = vld [vmem:[%s7 + $0xb0] sm:$0xff]
      %v513 = vld [vmem:[%s7 + $0xb8] sm:$0xff]
      %v514 = vld [vmem:[%s7 + $0xc0] sm:$0xff]
      %v515 = vld [vmem:[%s7 + $0xc8] sm:$0xff]
      %v516 = vld [vmem:[%s7 + $0xd0] sm:$0xff]
      %v517 = vld [vmem:[%s7 + $0xd8] sm:$0xff]
      %v518 = vld [vmem:[%s7 + $0xe0] sm:$0xff]
      %v519 = vld [vmem:[%s7 + $0xe8] sm:$0xff]
      %v520 = vld [vmem:[%s7 + $0xf0] sm:$0xff]
      %v521 = vld [vmem:[%s7 + $0xf8] sm:$0xff]
      %v522 = vld [vmem:[%s8] sm:$0x1]
      %v524 = vlaneseq
      %v525 = vshrl.u32 %v524, 7
      %v526 = vsub.s32 0, %v525
      %v527 = vrot.slane %v263, %v526
      %v528 = vlaneseq
      %v529 = vshrl.u32 %v528, 7
      %v530 = vsub.s32 1, %v529
      %v531 = vrot.slane %v263, %v530
      %v532 = vlaneseq
      %v533 = vshrl.u32 %v532, 7
      %v534 = vsub.s32 2, %v533
      %v535 = vrot.slane %v263, %v534
      %v536 = vlaneseq
      %v537 = vshrl.u32 %v536, 7
      %v538 = vsub.s32 3, %v537
      %v539 = vrot.slane %v263, %v538
      %v540 = vlaneseq
      %v541 = vshrl.u32 %v540, 7
      %v542 = vsub.s32 4, %v541
      %v543 = vrot.slane %v263, %v542
      %v544 = vlaneseq
      %v545 = vshrl.u32 %v544, 7
      %v546 = vsub.s32 5, %v545
      %v547 = vrot.slane %v263, %v546
      %554 = vmatprep.subr.mxu0 %v328
      %555 = vmatpush1.msra.mxu0 %v327
      %556 = vmatprep.subr.mxu0 %v326
      %557 = vmatpush1.msra.mxu0 %v325
      %558 = vmatprep.subr.mxu0 %v324
      %559 = vmatpush1.msra.mxu0 %v323
      %560 = vmatprep.subr.mxu0 %v322
      %561 = vmatpush1.msra.mxu0 %v321
      %562 = vmatprep.subr.mxu0 %v320
      %563 = vmatpush1.msra.mxu0 %v319
      %564 = vmatprep.subr.mxu0 %v318
      %565 = vmatpush1.msra.mxu0 %v317
      %566 = vmatprep.subr.mxu0 %v316
      %567 = vmatpush1.msra.mxu0 %v315
      %568 = vmatprep.subr.mxu0 %v314
      %569 = vmatpush1.msra.mxu0 %v313
      %570 = vmatprep.subr.mxu0 %v312
      %571 = vmatpush1.msra.mxu0 %v311
      %572 = vmatprep.subr.mxu0 %v310
      %573 = vmatpush1.msra.mxu0 %v309
      %574 = vmatprep.subr.mxu0 %v308
      %575 = vmatpush1.msra.mxu0 %v307
      %576 = vmatprep.subr.mxu0 %v306
      %577 = vmatpush1.msra.mxu0 %v305
      %578 = vmatprep.subr.mxu0 %v304
      %579 = vmatpush1.msra.mxu0 %v303
      %580 = vmatprep.subr.mxu0 %v302
      %581 = vmatpush1.msra.mxu0 %v301
      %582 = vmatprep.subr.mxu0 %v300
      %583 = vmatpush1.msra.mxu0 %v299
      %584 = vmatprep.subr.mxu0 %v298
      %585 = vmatpush1.msra.mxu0 %v297
      %586 = vmatprep.subr.mxu0 %v360
      %587 = vmatpush2.msra.mxu0 %v359
      %588 = vmatprep.subr.mxu0 %v358
      %589 = vmatpush2.msra.mxu0 %v357
      %590 = vmatprep.subr.mxu0 %v356
      %591 = vmatpush2.msra.mxu0 %v355
      %592 = vmatprep.subr.mxu0 %v354
      %593 = vmatpush2.msra.mxu0 %v353
      %594 = vmatprep.subr.mxu0 %v352
      %595 = vmatpush2.msra.mxu0 %v351
      %596 = vmatprep.subr.mxu0 %v350
      %597 = vmatpush2.msra.mxu0 %v349
      %598 = vmatprep.subr.mxu0 %v348
      %599 = vmatpush2.msra.mxu0 %v347
      %600 = vmatprep.subr.mxu0 %v346
      %601 = vmatpush2.msra.mxu0 %v345
      %602 = vmatprep.subr.mxu0 %v344
      %603 = vmatpush2.msra.mxu0 %v343
      %604 = vmatprep.subr.mxu0 %v342
      %605 = vmatpush2.msra.mxu0 %v341
      %606 = vmatprep.subr.mxu0 %v340
      %607 = vmatpush2.msra.mxu0 %v339
      %608 = vmatprep.subr.mxu0 %v338
      %609 = vmatpush2.msra.mxu0 %v337
      %610 = vmatprep.subr.mxu0 %v336
      %611 = vmatpush2.msra.mxu0 %v335
      %612 = vmatprep.subr.mxu0 %v334
      %613 = vmatpush2.msra.mxu0 %v333
      %614 = vmatprep.subr.mxu0 %v332
      %615 = vmatpush2.msra.mxu0 %v331
      %616 = vmatprep.subr.mxu0 %v330
      %617 = vmatpush2.msra.mxu0 %v329
      %618 = vmatprep.mubr.f32.mxu0 %v531
      %619 = vmatmul.mubr.f32.gmra.mxu0 %v527
      %v620 = vpop.f32.mrf.mxu0
      %v621 = vadd.f32 0.0, %v620
      %v622 = vpop.f32.mrf.mxu0
      %v623 = vadd.f32 0.0, %v622
      %624 = vdwg.mxu0
      %625 = vmatprep.subr.mxu0 %v392
      %626 = vmatpush1.msra.mxu0 %v391
      %627 = vmatprep.subr.mxu0 %v390
      %628 = vmatpush1.msra.mxu0 %v389
      %629 = vmatprep.subr.mxu0 %v388
      %630 = vmatpush1.msra.mxu0 %v387
      %631 = vmatprep.subr.mxu0 %v386
      %632 = vmatpush1.msra.mxu0 %v385
      %633 = vmatprep.subr.mxu0 %v384
      %634 = vmatpush1.msra.mxu0 %v383
      %635 = vmatprep.subr.mxu0 %v382
      %636 = vmatpush1.msra.mxu0 %v381
      %637 = vmatprep.subr.mxu0 %v380
      %638 = vmatpush1.msra.mxu0 %v379
      %639 = vmatprep.subr.mxu0 %v378
      %640 = vmatpush1.msra.mxu0 %v377
      %641 = vmatprep.subr.mxu0 %v376
      %642 = vmatpush1.msra.mxu0 %v375
      %643 = vmatprep.subr.mxu0 %v374
      %644 = vmatpush1.msra.mxu0 %v373
      %645 = vmatprep.subr.mxu0 %v372
      %646 = vmatpush1.msra.mxu0 %v371
      %647 = vmatprep.subr.mxu0 %v370
      %648 = vmatpush1.msra.mxu0 %v369
      %649 = vmatprep.subr.mxu0 %v368
      %650 = vmatpush1.msra.mxu0 %v367
      %651 = vmatprep.subr.mxu0 %v366
      %652 = vmatpush1.msra.mxu0 %v365
      %653 = vmatprep.subr.mxu0 %v364
      %654 = vmatpush1.msra.mxu0 %v363
      %655 = vmatprep.subr.mxu0 %v362
      %656 = vmatpush1.msra.mxu0 %v361
      %657 = vmatprep.subr.mxu0 %v424
      %658 = vmatpush2.msra.mxu0 %v423
      %659 = vmatprep.subr.mxu0 %v422
      %660 = vmatpush2.msra.mxu0 %v421
      %661 = vmatprep.subr.mxu0 %v420
      %662 = vmatpush2.msra.mxu0 %v419
      %663 = vmatprep.subr.mxu0 %v418
      %664 = vmatpush2.msra.mxu0 %v417
      %665 = vmatprep.subr.mxu0 %v416
      %666 = vmatpush2.msra.mxu0 %v415
      %667 = vmatprep.subr.mxu0 %v414
      %668 = vmatpush2.msra.mxu0 %v413
      %669 = vmatprep.subr.mxu0 %v412
      %670 = vmatpush2.msra.mxu0 %v411
      %671 = vmatprep.subr.mxu0 %v410
      %672 = vmatpush2.msra.mxu0 %v409
      %673 = vmatprep.subr.mxu0 %v408
      %674 = vmatpush2.msra.mxu0 %v407
      %675 = vmatprep.subr.mxu0 %v406
      %676 = vmatpush2.msra.mxu0 %v405
      %677 = vmatprep.subr.mxu0 %v404
      %678 = vmatpush2.msra.mxu0 %v403
      %679 = vmatprep.subr.mxu0 %v402
      %680 = vmatpush2.msra.mxu0 %v401
      %681 = vmatprep.subr.mxu0 %v400
      %682 = vmatpush2.msra.mxu0 %v399
      %683 = vmatprep.subr.mxu0 %v398
      %684 = vmatpush2.msra.mxu0 %v397
      %685 = vmatprep.subr.mxu0 %v396
      %686 = vmatpush2.msra.mxu0 %v395
      %687 = vmatprep.subr.mxu0 %v394
      %688 = vmatpush2.msra.mxu0 %v393
      %689 = vmatprep.mubr.f32.mxu0 %v539
      %690 = vmatmul.mubr.f32.gmra.mxu0 %v535
      %v691 = vpop.f32.mrf.mxu0
      %v692 = vadd.f32 %v621, %v691
      %v693 = vpop.f32.mrf.mxu0
      %v694 = vadd.f32 %v623, %v693
      %695 = vdwg.mxu0
      %696 = vmatprep.subr.mxu0 %v456
      %697 = vmatpush1.msra.mxu0 %v455
      %698 = vmatprep.subr.mxu0 %v454
      %699 = vmatpush1.msra.mxu0 %v453
      %700 = vmatprep.subr.mxu0 %v452
      %701 = vmatpush1.msra.mxu0 %v451
      %702 = vmatprep.subr.mxu0 %v450
      %703 = vmatpush1.msra.mxu0 %v449
      %704 = vmatprep.subr.mxu0 %v448
      %705 = vmatpush1.msra.mxu0 %v447
      %706 = vmatprep.subr.mxu0 %v446
      %707 = vmatpush1.msra.mxu0 %v445
      %708 = vmatprep.subr.mxu0 %v444
      %709 = vmatpush1.msra.mxu0 %v443
      %710 = vmatprep.subr.mxu0 %v442
      %711 = vmatpush1.msra.mxu0 %v441
      %712 = vmatprep.subr.mxu0 %v440
      %713 = vmatpush1.msra.mxu0 %v439
      %714 = vmatprep.subr.mxu0 %v438
      %715 = vmatpush1.msra.mxu0 %v437
      %716 = vmatprep.subr.mxu0 %v436
      %717 = vmatpush1.msra.mxu0 %v435
      %718 = vmatprep.subr.mxu0 %v434
      %719 = vmatpush1.msra.mxu0 %v433
      %720 = vmatprep.subr.mxu0 %v432
      %721 = vmatpush1.msra.mxu0 %v431
      %722 = vmatprep.subr.mxu0 %v430
      %723 = vmatpush1.msra.mxu0 %v429
      %724 = vmatprep.subr.mxu0 %v428
      %725 = vmatpush1.msra.mxu0 %v427
      %726 = vmatprep.subr.mxu0 %v426
      %727 = vmatpush1.msra.mxu0 %v425
      %728 = vmatprep.subr.mxu0 %v488
      %729 = vmatpush2.msra.mxu0 %v487
      %730 = vmatprep.subr.mxu0 %v486
      %731 = vmatpush2.msra.mxu0 %v485
      %732 = vmatprep.subr.mxu0 %v484
      %733 = vmatpush2.msra.mxu0 %v483
      %734 = vmatprep.subr.mxu0 %v482
      %735 = vmatpush2.msra.mxu0 %v481
      %736 = vmatprep.subr.mxu0 %v480
      %737 = vmatpush2.msra.mxu0 %v479
      %738 = vmatprep.subr.mxu0 %v478
      %739 = vmatpush2.msra.mxu0 %v477
      %740 = vmatprep.subr.mxu0 %v476
      %741 = vmatpush2.msra.mxu0 %v475
      %742 = vmatprep.subr.mxu0 %v474
      %743 = vmatpush2.msra.mxu0 %v473
      %744 = vmatprep.subr.mxu0 %v472
      %745 = vmatpush2.msra.mxu0 %v471
      %746 = vmatprep.subr.mxu0 %v470
      %747 = vmatpush2.msra.mxu0 %v469
      %748 = vmatprep.subr.mxu0 %v468
      %749 = vmatpush2.msra.mxu0 %v467
      %750 = vmatprep.subr.mxu0 %v466
      %751 = vmatpush2.msra.mxu0 %v465
      %752 = vmatprep.subr.mxu0 %v464
      %753 = vmatpush2.msra.mxu0 %v463
      %754 = vmatprep.subr.mxu0 %v462
      %755 = vmatpush2.msra.mxu0 %v461
      %756 = vmatprep.subr.mxu0 %v460
      %757 = vmatpush2.msra.mxu0 %v459
      %758 = vmatprep.subr.mxu0 %v458
      %759 = vmatpush2.msra.mxu0 %v457
      %760 = vmatprep.mubr.f32.mxu0 %v547
      %761 = vmatmul.mubr.f32.gmra.mxu0 %v543
      %v762 = vpop.f32.mrf.mxu0
      %v763 = vadd.f32 %v692, %v762
      %v764 = vpop.f32.mrf.mxu0
      %v765 = vadd.f32 %v694, %v764
      %766 = vdwg.mxu0
      %767 = vmatprep.subr.mxu0 %v296
      %768 = vmatpush1.msra.mxu0 %v295
      %769 = vmatprep.subr.mxu0 %v294
      %770 = vmatpush1.msra.mxu0 %v293
      %771 = vmatprep.subr.mxu0 %v292
      %772 = vmatpush1.msra.mxu0 %v291
      %773 = vmatprep.subr.mxu0 %v290
      %774 = vmatpush1.msra.mxu0 %v289
      %775 = vmatprep.subr.mxu0 %v288
      %776 = vmatpush1.msra.mxu0 %v287
      %777 = vmatprep.subr.mxu0 %v286
      %778 = vmatpush1.msra.mxu0 %v285
      %779 = vmatprep.subr.mxu0 %v284
      %780 = vmatpush1.msra.mxu0 %v283
      %781 = vmatprep.subr.mxu0 %v282
      %782 = vmatpush1.msra.mxu0 %v281
      %783 = vmatprep.subr.mxu0 %v280
      %784 = vmatpush1.msra.mxu0 %v279
      %785 = vmatprep.subr.mxu0 %v278
      %786 = vmatpush1.msra.mxu0 %v277
      %787 = vmatprep.subr.mxu0 %v276
      %788 = vmatpush1.msra.mxu0 %v275
      %789 = vmatprep.subr.mxu0 %v274
      %790 = vmatpush1.msra.mxu0 %v273
      %791 = vmatprep.subr.mxu0 %v272
      %792 = vmatpush1.msra.mxu0 %v271
      %793 = vmatprep.subr.mxu0 %v270
      %794 = vmatpush1.msra.mxu0 %v269
      %795 = vmatprep.subr.mxu0 %v268
      %796 = vmatpush1.msra.mxu0 %v267
      %797 = vmatprep.subr.mxu0 %v266
      %798 = vmatpush1.msra.mxu0 %v265
      %799 = vmatprep.subr.mxu0 0.0
      %800 = vmatpush2.msra.mxu0 0.0
      %801 = vmatprep.subr.mxu0 0.0
      %802 = vmatpush2.msra.mxu0 0.0
      %803 = vmatprep.subr.mxu0 0.0
      %804 = vmatpush2.msra.mxu0 0.0
      %805 = vmatprep.subr.mxu0 0.0
      %806 = vmatpush2.msra.mxu0 0.0
      %807 = vmatprep.subr.mxu0 0.0
      %808 = vmatpush2.msra.mxu0 0.0
      %809 = vmatprep.subr.mxu0 0.0
      %810 = vmatpush2.msra.mxu0 0.0
      %811 = vmatprep.subr.mxu0 0.0
      %812 = vmatpush2.msra.mxu0 0.0
      %813 = vmatprep.subr.mxu0 0.0
      %814 = vmatpush2.msra.mxu0 0.0
      %815 = vmatprep.subr.mxu0 0.0
      %816 = vmatpush2.msra.mxu0 0.0
      %817 = vmatprep.subr.mxu0 0.0
      %818 = vmatpush2.msra.mxu0 0.0
      %819 = vmatprep.subr.mxu0 0.0
      %820 = vmatpush2.msra.mxu0 0.0
      %821 = vmatprep.subr.mxu0 0.0
      %822 = vmatpush2.msra.mxu0 0.0
      %823 = vmatprep.subr.mxu0 0.0
      %824 = vmatpush2.msra.mxu0 0.0
      %825 = vmatprep.subr.mxu0 0.0
      %826 = vmatpush2.msra.mxu0 0.0
      %827 = vmatprep.subr.mxu0 0.0
      %828 = vmatpush2.msra.mxu0 0.0
      %829 = vmatprep.subr.mxu0 0.0
      %830 = vmatpush2.msra.mxu0 0.0
      %831 = vmatprep.mubr.f32.mxu0 0.0
      %832 = vmatmul.mubr.f32.gmra.mxu0 %v259
      %v833 = vpop.f32.mrf.mxu0
      %v834 = vadd.f32 %v763, %v833
      %v835 = vpop.f32.mrf.mxu0
      %v836 = vadd.f32 %v765, %v835
      %837 = vdwg.mxu0
      %v839 = vlaneseq
      %v840 = vshrl.u32 %v839, 7
      %v841 = vsub.s32 0, %v840
      %v842 = vrot.slane %v489, %v841
      %v843 = vlaneseq
      %v844 = vshrl.u32 %v843, 7
      %v845 = vsub.s32 1, %v844
      %v846 = vrot.slane %v489, %v845
      %v849 = vadd.f32 %v834, %v842
      %v850 = vadd.f32 %v836, %v846
      %vm851 = vcmp.ge.f32.partialorder %v849, 0.0
      %vm852 = vcmp.ge.f32.partialorder %v850, 0.0
      %v853 = vmul.f32 %v849, 0.2
      %v854 = vmul.f32 %v850, 0.2
      %v855 = vsel %vm851, %v849, %v853
      %v856 = vsel %vm852, %v850, %v854
      %857 = vmatprep.subr.mxu0 0.0
      %858 = vmatpush1.msra.mxu0 %v505
      %859 = vmatprep.subr.mxu0 0.0
      %860 = vmatpush1.msra.mxu0 %v504
      %861 = vmatprep.subr.mxu0 0.0
      %862 = vmatpush1.msra.mxu0 %v503
      %863 = vmatprep.subr.mxu0 0.0
      %864 = vmatpush1.msra.mxu0 %v502
      %865 = vmatprep.subr.mxu0 0.0
      %866 = vmatpush1.msra.mxu0 %v501
      %867 = vmatprep.subr.mxu0 0.0
      %868 = vmatpush1.msra.mxu0 %v500
      %869 = vmatprep.subr.mxu0 0.0
      %870 = vmatpush1.msra.mxu0 %v499
      %871 = vmatprep.subr.mxu0 0.0
      %872 = vmatpush1.msra.mxu0 %v498
      %873 = vmatprep.subr.mxu0 0.0
      %874 = vmatpush1.msra.mxu0 %v497
      %875 = vmatprep.subr.mxu0 0.0
      %876 = vmatpush1.msra.mxu0 %v496
      %877 = vmatprep.subr.mxu0 0.0
      %878 = vmatpush1.msra.mxu0 %v495
      %879 = vmatprep.subr.mxu0 0.0
      %880 = vmatpush1.msra.mxu0 %v494
      %881 = vmatprep.subr.mxu0 0.0
      %882 = vmatpush1.msra.mxu0 %v493
      %883 = vmatprep.subr.mxu0 0.0
      %884 = vmatpush1.msra.mxu0 %v492
      %885 = vmatprep.subr.mxu0 0.0
      %886 = vmatpush1.msra.mxu0 %v491
      %887 = vmatprep.subr.mxu0 0.0
      %888 = vmatpush1.msra.mxu0 %v490
      %889 = vmatprep.subr.mxu0 0.0
      %890 = vmatpush2.msra.mxu0 %v521
      %891 = vmatprep.subr.mxu0 0.0
      %892 = vmatpush2.msra.mxu0 %v520
      %893 = vmatprep.subr.mxu0 0.0
      %894 = vmatpush2.msra.mxu0 %v519
      %895 = vmatprep.subr.mxu0 0.0
      %896 = vmatpush2.msra.mxu0 %v518
      %897 = vmatprep.subr.mxu0 0.0
      %898 = vmatpush2.msra.mxu0 %v517
      %899 = vmatprep.subr.mxu0 0.0
      %900 = vmatpush2.msra.mxu0 %v516
      %901 = vmatprep.subr.mxu0 0.0
      %902 = vmatpush2.msra.mxu0 %v515
      %903 = vmatprep.subr.mxu0 0.0
      %904 = vmatpush2.msra.mxu0 %v514
      %905 = vmatprep.subr.mxu0 0.0
      %906 = vmatpush2.msra.mxu0 %v513
      %907 = vmatprep.subr.mxu0 0.0
      %908 = vmatpush2.msra.mxu0 %v512
      %909 = vmatprep.subr.mxu0 0.0
      %910 = vmatpush2.msra.mxu0 %v511
      %911 = vmatprep.subr.mxu0 0.0
      %912 = vmatpush2.msra.mxu0 %v510
      %913 = vmatprep.subr.mxu0 0.0
      %914 = vmatpush2.msra.mxu0 %v509
      %915 = vmatprep.subr.mxu0 0.0
      %916 = vmatpush2.msra.mxu0 %v508
      %917 = vmatprep.subr.mxu0 0.0
      %918 = vmatpush2.msra.mxu0 %v507
      %919 = vmatprep.subr.mxu0 0.0
      %920 = vmatpush2.msra.mxu0 %v506
      %921 = vmatprep.mubr.f32.mxu0 %v856
      %922 = vmatmul.mubr.f32.gmra.mxu0 %v855
      %v923 = vpop.f32.mrf.mxu0
      %v924 = vadd.f32 %v522, %v923
      %v925 = vpop.f32.mrf.mxu0
      %926 = vdwg.mxu0
      %vm927 = vcmask 8192
      %928 = vst.msk [vmem:[#allocation3] sm:$0x1] %vm927, %v924
      %v930 = vlaneseq
      %v931 = vshrl.u32 %v930, 7
      %v932 = vsub.s32 6, %v931
      %v933 = vrot.slane %v263, %v932
      %v934 = vlaneseq
      %v935 = vshrl.u32 %v934, 7
      %v936 = vsub.s32 7, %v935
      %v937 = vrot.slane %v263, %v936
      %v938 = vlaneseq
      %v939 = vshrl.u32 %v938, 7
      %v940 = vsub.s32 0, %v939
      %v941 = vrot.slane %v264, %v940
      %v942 = vlaneseq
      %v943 = vshrl.u32 %v942, 7
      %v944 = vsub.s32 1, %v943
      %v945 = vrot.slane %v264, %v944
      %v946 = vlaneseq
      %v947 = vshrl.u32 %v946, 7
      %v948 = vsub.s32 2, %v947
      %v949 = vrot.slane %v264, %v948
      %v950 = vlaneseq
      %v951 = vshrl.u32 %v950, 7
      %v952 = vsub.s32 3, %v951
      %v953 = vrot.slane %v264, %v952
      %960 = vmatprep.subr.mxu0 %v328
      %961 = vmatpush1.msra.mxu0 %v327
      %962 = vmatprep.subr.mxu0 %v326
      %963 = vmatpush1.msra.mxu0 %v325
      %964 = vmatprep.subr.mxu0 %v324
      %965 = vmatpush1.msra.mxu0 %v323
      %966 = vmatprep.subr.mxu0 %v322
      %967 = vmatpush1.msra.mxu0 %v321
      %968 = vmatprep.subr.mxu0 %v320
      %969 = vmatpush1.msra.mxu0 %v319
      %970 = vmatprep.subr.mxu0 %v318
      %971 = vmatpush1.msra.mxu0 %v317
      %972 = vmatprep.subr.mxu0 %v316
      %973 = vmatpush1.msra.mxu0 %v315
      %974 = vmatprep.subr.mxu0 %v314
      %975 = vmatpush1.msra.mxu0 %v313
      %976 = vmatprep.subr.mxu0 %v312
      %977 = vmatpush1.msra.mxu0 %v311
      %978 = vmatprep.subr.mxu0 %v310
      %979 = vmatpush1.msra.mxu0 %v309
      %980 = vmatprep.subr.mxu0 %v308
      %981 = vmatpush1.msra.mxu0 %v307
      %982 = vmatprep.subr.mxu0 %v306
      %983 = vmatpush1.msra.mxu0 %v305
      %984 = vmatprep.subr.mxu0 %v304
      %985 = vmatpush1.msra.mxu0 %v303
      %986 = vmatprep.subr.mxu0 %v302
      %987 = vmatpush1.msra.mxu0 %v301
      %988 = vmatprep.subr.mxu0 %v300
      %989 = vmatpush1.msra.mxu0 %v299
      %990 = vmatprep.subr.mxu0 %v298
      %991 = vmatpush1.msra.mxu0 %v297
      %992 = vmatprep.subr.mxu0 %v360
      %993 = vmatpush2.msra.mxu0 %v359
      %994 = vmatprep.subr.mxu0 %v358
      %995 = vmatpush2.msra.mxu0 %v357
      %996 = vmatprep.subr.mxu0 %v356
      %997 = vmatpush2.msra.mxu0 %v355
      %998 = vmatprep.subr.mxu0 %v354
      %999 = vmatpush2.msra.mxu0 %v353
      %1000 = vmatprep.subr.mxu0 %v352
      %1001 = vmatpush2.msra.mxu0 %v351
      %1002 = vmatprep.subr.mxu0 %v350
      %1003 = vmatpush2.msra.mxu0 %v349
      %1004 = vmatprep.subr.mxu0 %v348
      %1005 = vmatpush2.msra.mxu0 %v347
      %1006 = vmatprep.subr.mxu0 %v346
      %1007 = vmatpush2.msra.mxu0 %v345
      %1008 = vmatprep.subr.mxu0 %v344
      %1009 = vmatpush2.msra.mxu0 %v343
      %1010 = vmatprep.subr.mxu0 %v342
      %1011 = vmatpush2.msra.mxu0 %v341
      %1012 = vmatprep.subr.mxu0 %v340
      %1013 = vmatpush2.msra.mxu0 %v339
      %1014 = vmatprep.subr.mxu0 %v338
      %1015 = vmatpush2.msra.mxu0 %v337
      %1016 = vmatprep.subr.mxu0 %v336
      %1017 = vmatpush2.msra.mxu0 %v335
      %1018 = vmatprep.subr.mxu0 %v334
      %1019 = vmatpush2.msra.mxu0 %v333
      %1020 = vmatprep.subr.mxu0 %v332
      %1021 = vmatpush2.msra.mxu0 %v331
      %1022 = vmatprep.subr.mxu0 %v330
      %1023 = vmatpush2.msra.mxu0 %v329
      %1024 = vmatprep.mubr.f32.mxu0 %v937
      %1025 = vmatmul.mubr.f32.gmra.mxu0 %v933
      %v1026 = vpop.f32.mrf.mxu0
      %v1027 = vadd.f32 0.0, %v1026
      %v1028 = vpop.f32.mrf.mxu0
      %v1029 = vadd.f32 0.0, %v1028
      %1030 = vdwg.mxu0
      %1031 = vmatprep.subr.mxu0 %v392
      %1032 = vmatpush1.msra.mxu0 %v391
      %1033 = vmatprep.subr.mxu0 %v390
      %1034 = vmatpush1.msra.mxu0 %v389
      %1035 = vmatprep.subr.mxu0 %v388
      %1036 = vmatpush1.msra.mxu0 %v387
      %1037 = vmatprep.subr.mxu0 %v386
      %1038 = vmatpush1.msra.mxu0 %v385
      %1039 = vmatprep.subr.mxu0 %v384
      %1040 = vmatpush1.msra.mxu0 %v383
      %1041 = vmatprep.subr.mxu0 %v382
      %1042 = vmatpush1.msra.mxu0 %v381
      %1043 = vmatprep.subr.mxu0 %v380
      %1044 = vmatpush1.msra.mxu0 %v379
      %1045 = vmatprep.subr.mxu0 %v378
      %1046 = vmatpush1.msra.mxu0 %v377
      %1047 = vmatprep.subr.mxu0 %v376
      %1048 = vmatpush1.msra.mxu0 %v375
      %1049 = vmatprep.subr.mxu0 %v374
      %1050 = vmatpush1.msra.mxu0 %v373
      %1051 = vmatprep.subr.mxu0 %v372
      %1052 = vmatpush1.msra.mxu0 %v371
      %1053 = vmatprep.subr.mxu0 %v370
      %1054 = vmatpush1.msra.mxu0 %v369
      %1055 = vmatprep.subr.mxu0 %v368
      %1056 = vmatpush1.msra.mxu0 %v367
      %1057 = vmatprep.subr.mxu0 %v366
      %1058 = vmatpush1.msra.mxu0 %v365
      %1059 = vmatprep.subr.mxu0 %v364
      %1060 = vmatpush1.msra.mxu0 %v363
      %1061 = vmatprep.subr.mxu0 %v362
      %1062 = vmatpush1.msra.mxu0 %v361
      %1063 = vmatprep.subr.mxu0 %v424
      %1064 = vmatpush2.msra.mxu0 %v423
      %1065 = vmatprep.subr.mxu0 %v422
      %1066 = vmatpush2.msra.mxu0 %v421
      %1067 = vmatprep.subr.mxu0 %v420
      %1068 = vmatpush2.msra.mxu0 %v419
      %1069 = vmatprep.subr.mxu0 %v418
      %1070 = vmatpush2.msra.mxu0 %v417
      %1071 = vmatprep.subr.mxu0 %v416
      %1072 = vmatpush2.msra.mxu0 %v415
      %1073 = vmatprep.subr.mxu0 %v414
      %1074 = vmatpush2.msra.mxu0 %v413
      %1075 = vmatprep.subr.mxu0 %v412
      %1076 = vmatpush2.msra.mxu0 %v411
      %1077 = vmatprep.subr.mxu0 %v410
      %1078 = vmatpush2.msra.mxu0 %v409
      %1079 = vmatprep.subr.mxu0 %v408
      %1080 = vmatpush2.msra.mxu0 %v407
      %1081 = vmatprep.subr.mxu0 %v406
      %1082 = vmatpush2.msra.mxu0 %v405
      %1083 = vmatprep.subr.mxu0 %v404
      %1084 = vmatpush2.msra.mxu0 %v403
      %1085 = vmatprep.subr.mxu0 %v402
      %1086 = vmatpush2.msra.mxu0 %v401
      %1087 = vmatprep.subr.mxu0 %v400
      %1088 = vmatpush2.msra.mxu0 %v399
      %1089 = vmatprep.subr.mxu0 %v398
      %1090 = vmatpush2.msra.mxu0 %v397
      %1091 = vmatprep.subr.mxu0 %v396
      %1092 = vmatpush2.msra.mxu0 %v395
      %1093 = vmatprep.subr.mxu0 %v394
      %1094 = vmatpush2.msra.mxu0 %v393
      %1095 = vmatprep.mubr.f32.mxu0 %v945
      %1096 = vmatmul.mubr.f32.gmra.mxu0 %v941
      %v1097 = vpop.f32.mrf.mxu0
      %v1098 = vadd.f32 %v1027, %v1097
      %v1099 = vpop.f32.mrf.mxu0
      %v1100 = vadd.f32 %v1029, %v1099
      %1101 = vdwg.mxu0
      %1102 = vmatprep.subr.mxu0 %v456
      %1103 = vmatpush1.msra.mxu0 %v455
      %1104 = vmatprep.subr.mxu0 %v454
      %1105 = vmatpush1.msra.mxu0 %v453
      %1106 = vmatprep.subr.mxu0 %v452
      %1107 = vmatpush1.msra.mxu0 %v451
      %1108 = vmatprep.subr.mxu0 %v450
      %1109 = vmatpush1.msra.mxu0 %v449
      %1110 = vmatprep.subr.mxu0 %v448
      %1111 = vmatpush1.msra.mxu0 %v447
      %1112 = vmatprep.subr.mxu0 %v446
      %1113 = vmatpush1.msra.mxu0 %v445
      %1114 = vmatprep.subr.mxu0 %v444
      %1115 = vmatpush1.msra.mxu0 %v443
      %1116 = vmatprep.subr.mxu0 %v442
      %1117 = vmatpush1.msra.mxu0 %v441
      %1118 = vmatprep.subr.mxu0 %v440
      %1119 = vmatpush1.msra.mxu0 %v439
      %1120 = vmatprep.subr.mxu0 %v438
      %1121 = vmatpush1.msra.mxu0 %v437
      %1122 = vmatprep.subr.mxu0 %v436
      %1123 = vmatpush1.msra.mxu0 %v435
      %1124 = vmatprep.subr.mxu0 %v434
      %1125 = vmatpush1.msra.mxu0 %v433
      %1126 = vmatprep.subr.mxu0 %v432
      %1127 = vmatpush1.msra.mxu0 %v431
      %1128 = vmatprep.subr.mxu0 %v430
      %1129 = vmatpush1.msra.mxu0 %v429
      %1130 = vmatprep.subr.mxu0 %v428
      %1131 = vmatpush1.msra.mxu0 %v427
      %1132 = vmatprep.subr.mxu0 %v426
      %1133 = vmatpush1.msra.mxu0 %v425
      %1134 = vmatprep.subr.mxu0 %v488
      %1135 = vmatpush2.msra.mxu0 %v487
      %1136 = vmatprep.subr.mxu0 %v486
      %1137 = vmatpush2.msra.mxu0 %v485
      %1138 = vmatprep.subr.mxu0 %v484
      %1139 = vmatpush2.msra.mxu0 %v483
      %1140 = vmatprep.subr.mxu0 %v482
      %1141 = vmatpush2.msra.mxu0 %v481
      %1142 = vmatprep.subr.mxu0 %v480
      %1143 = vmatpush2.msra.mxu0 %v479
      %1144 = vmatprep.subr.mxu0 %v478
      %1145 = vmatpush2.msra.mxu0 %v477
      %1146 = vmatprep.subr.mxu0 %v476
      %1147 = vmatpush2.msra.mxu0 %v475
      %1148 = vmatprep.subr.mxu0 %v474
      %1149 = vmatpush2.msra.mxu0 %v473
      %1150 = vmatprep.subr.mxu0 %v472
      %1151 = vmatpush2.msra.mxu0 %v471
      %1152 = vmatprep.subr.mxu0 %v470
      %1153 = vmatpush2.msra.mxu0 %v469
      %1154 = vmatprep.subr.mxu0 %v468
      %1155 = vmatpush2.msra.mxu0 %v467
      %1156 = vmatprep.subr.mxu0 %v466
      %1157 = vmatpush2.msra.mxu0 %v465
      %1158 = vmatprep.subr.mxu0 %v464
      %1159 = vmatpush2.msra.mxu0 %v463
      %1160 = vmatprep.subr.mxu0 %v462
      %1161 = vmatpush2.msra.mxu0 %v461
      %1162 = vmatprep.subr.mxu0 %v460
      %1163 = vmatpush2.msra.mxu0 %v459
      %1164 = vmatprep.subr.mxu0 %v458
      %1165 = vmatpush2.msra.mxu0 %v457
      %1166 = vmatprep.mubr.f32.mxu0 %v953
      %1167 = vmatmul.mubr.f32.gmra.mxu0 %v949
      %v1168 = vpop.f32.mrf.mxu0
      %v1169 = vadd.f32 %v1098, %v1168
      %v1170 = vpop.f32.mrf.mxu0
      %v1171 = vadd.f32 %v1100, %v1170
      %1172 = vdwg.mxu0
      %1173 = vmatprep.subr.mxu0 %v296
      %1174 = vmatpush1.msra.mxu0 %v295
      %1175 = vmatprep.subr.mxu0 %v294
      %1176 = vmatpush1.msra.mxu0 %v293
      %1177 = vmatprep.subr.mxu0 %v292
      %1178 = vmatpush1.msra.mxu0 %v291
      %1179 = vmatprep.subr.mxu0 %v290
      %1180 = vmatpush1.msra.mxu0 %v289
      %1181 = vmatprep.subr.mxu0 %v288
      %1182 = vmatpush1.msra.mxu0 %v287
      %1183 = vmatprep.subr.mxu0 %v286
      %1184 = vmatpush1.msra.mxu0 %v285
      %1185 = vmatprep.subr.mxu0 %v284
      %1186 = vmatpush1.msra.mxu0 %v283
      %1187 = vmatprep.subr.mxu0 %v282
      %1188 = vmatpush1.msra.mxu0 %v281
      %1189 = vmatprep.subr.mxu0 %v280
      %1190 = vmatpush1.msra.mxu0 %v279
      %1191 = vmatprep.subr.mxu0 %v278
      %1192 = vmatpush1.msra.mxu0 %v277
      %1193 = vmatprep.subr.mxu0 %v276
      %1194 = vmatpush1.msra.mxu0 %v275
      %1195 = vmatprep.subr.mxu0 %v274
      %1196 = vmatpush1.msra.mxu0 %v273
      %1197 = vmatprep.subr.mxu0 %v272
      %1198 = vmatpush1.msra.mxu0 %v271
      %1199 = vmatprep.subr.mxu0 %v270
      %1200 = vmatpush1.msra.mxu0 %v269
      %1201 = vmatprep.subr.mxu0 %v268
      %1202 = vmatpush1.msra.mxu0 %v267
      %1203 = vmatprep.subr.mxu0 %v266
      %1204 = vmatpush1.msra.mxu0 %v265
      %1205 = vmatprep.subr.mxu0 0.0
      %1206 = vmatpush2.msra.mxu0 0.0
      %1207 = vmatprep.subr.mxu0 0.0
      %1208 = vmatpush2.msra.mxu0 0.0
      %1209 = vmatprep.subr.mxu0 0.0
      %1210 = vmatpush2.msra.mxu0 0.0
      %1211 = vmatprep.subr.mxu0 0.0
      %1212 = vmatpush2.msra.mxu0 0.0
      %1213 = vmatprep.subr.mxu0 0.0
      %1214 = vmatpush2.msra.mxu0 0.0
      %1215 = vmatprep.subr.mxu0 0.0
      %1216 = vmatpush2.msra.mxu0 0.0
      %1217 = vmatprep.subr.mxu0 0.0
      %1218 = vmatpush2.msra.mxu0 0.0
      %1219 = vmatprep.subr.mxu0 0.0
      %1220 = vmatpush2.msra.mxu0 0.0
      %1221 = vmatprep.subr.mxu0 0.0
      %1222 = vmatpush2.msra.mxu0 0.0
      %1223 = vmatprep.subr.mxu0 0.0
      %1224 = vmatpush2.msra.mxu0 0.0
      %1225 = vmatprep.subr.mxu0 0.0
      %1226 = vmatpush2.msra.mxu0 0.0
      %1227 = vmatprep.subr.mxu0 0.0
      %1228 = vmatpush2.msra.mxu0 0.0
      %1229 = vmatprep.subr.mxu0 0.0
      %1230 = vmatpush2.msra.mxu0 0.0
      %1231 = vmatprep.subr.mxu0 0.0
      %1232 = vmatpush2.msra.mxu0 0.0
      %1233 = vmatprep.subr.mxu0 0.0
      %1234 = vmatpush2.msra.mxu0 0.0
      %1235 = vmatprep.subr.mxu0 0.0
      %1236 = vmatpush2.msra.mxu0 0.0
      %1237 = vmatprep.mubr.f32.mxu0 0.0
      %1238 = vmatmul.mubr.f32.gmra.mxu0 %v260
      %v1239 = vpop.f32.mrf.mxu0
      %v1240 = vadd.f32 %v1169, %v1239
      %v1241 = vpop.f32.mrf.mxu0
      %v1242 = vadd.f32 %v1171, %v1241
      %1243 = vdwg.mxu0
      %v1244 = vadd.f32 %v1240, %v842
      %v1245 = vadd.f32 %v1242, %v846
      %vm1246 = vcmp.ge.f32.partialorder %v1244, 0.0
      %vm1247 = vcmp.ge.f32.partialorder %v1245, 0.0
      %v1248 = vmul.f32 %v1244, 0.2
      %v1249 = vmul.f32 %v1245, 0.2
      %v1250 = vsel %vm1246, %v1244, %v1248
      %v1251 = vsel %vm1247, %v1245, %v1249
      %1252 = vmatprep.subr.mxu0 0.0
      %1253 = vmatpush1.msra.mxu0 %v505
      %1254 = vmatprep.subr.mxu0 0.0
      %1255 = vmatpush1.msra.mxu0 %v504
      %1256 = vmatprep.subr.mxu0 0.0
      %1257 = vmatpush1.msra.mxu0 %v503
      %1258 = vmatprep.subr.mxu0 0.0
      %1259 = vmatpush1.msra.mxu0 %v502
      %1260 = vmatprep.subr.mxu0 0.0
      %1261 = vmatpush1.msra.mxu0 %v501
      %1262 = vmatprep.subr.mxu0 0.0
      %1263 = vmatpush1.msra.mxu0 %v500
      %1264 = vmatprep.subr.mxu0 0.0
      %1265 = vmatpush1.msra.mxu0 %v499
      %1266 = vmatprep.subr.mxu0 0.0
      %1267 = vmatpush1.msra.mxu0 %v498
      %1268 = vmatprep.subr.mxu0 0.0
      %1269 = vmatpush1.msra.mxu0 %v497
      %1270 = vmatprep.subr.mxu0 0.0
      %1271 = vmatpush1.msra.mxu0 %v496
      %1272 = vmatprep.subr.mxu0 0.0
      %1273 = vmatpush1.msra.mxu0 %v495
      %1274 = vmatprep.subr.mxu0 0.0
      %1275 = vmatpush1.msra.mxu0 %v494
      %1276 = vmatprep.subr.mxu0 0.0
      %1277 = vmatpush1.msra.mxu0 %v493
      %1278 = vmatprep.subr.mxu0 0.0
      %1279 = vmatpush1.msra.mxu0 %v492
      %1280 = vmatprep.subr.mxu0 0.0
      %1281 = vmatpush1.msra.mxu0 %v491
      %1282 = vmatprep.subr.mxu0 0.0
      %1283 = vmatpush1.msra.mxu0 %v490
      %1284 = vmatprep.subr.mxu0 0.0
      %1285 = vmatpush2.msra.mxu0 %v521
      %1286 = vmatprep.subr.mxu0 0.0
      %1287 = vmatpush2.msra.mxu0 %v520
      %1288 = vmatprep.subr.mxu0 0.0
      %1289 = vmatpush2.msra.mxu0 %v519
      %1290 = vmatprep.subr.mxu0 0.0
      %1291 = vmatpush2.msra.mxu0 %v518
      %1292 = vmatprep.subr.mxu0 0.0
      %1293 = vmatpush2.msra.mxu0 %v517
      %1294 = vmatprep.subr.mxu0 0.0
      %1295 = vmatpush2.msra.mxu0 %v516
      %1296 = vmatprep.subr.mxu0 0.0
      %1297 = vmatpush2.msra.mxu0 %v515
      %1298 = vmatprep.subr.mxu0 0.0
      %1299 = vmatpush2.msra.mxu0 %v514
      %1300 = vmatprep.subr.mxu0 0.0
      %1301 = vmatpush2.msra.mxu0 %v513
      %1302 = vmatprep.subr.mxu0 0.0
      %1303 = vmatpush2.msra.mxu0 %v512
      %1304 = vmatprep.subr.mxu0 0.0
      %1305 = vmatpush2.msra.mxu0 %v511
      %1306 = vmatprep.subr.mxu0 0.0
      %1307 = vmatpush2.msra.mxu0 %v510
      %1308 = vmatprep.subr.mxu0 0.0
      %1309 = vmatpush2.msra.mxu0 %v509
      %1310 = vmatprep.subr.mxu0 0.0
      %1311 = vmatpush2.msra.mxu0 %v508
      %1312 = vmatprep.subr.mxu0 0.0
      %1313 = vmatpush2.msra.mxu0 %v507
      %1314 = vmatprep.subr.mxu0 0.0
      %1315 = vmatpush2.msra.mxu0 %v506
      %1316 = vmatprep.mubr.f32.mxu0 %v1251
      %1317 = vmatmul.mubr.f32.gmra.mxu0 %v1250
      %v1318 = vpop.f32.mrf.mxu0
      %v1319 = vadd.f32 %v522, %v1318
      %v1320 = vpop.f32.mrf.mxu0
      %1321 = vdwg.mxu0
      %1322 = vst.msk [vmem:[#allocation3 + $0x1] sm:$0x1] %vm927, %v1319
    $region45: #{average_pre_classify.3} parent=1 // pred_fallthru
      _
    // Predicated region
    $region46: #{average_pre_classify.3} parent=1 // pred_check
      _
    $region47: #{average_pre_classify.3} parent=1 // pred_check_branch
      %1324 = sbr.rel (0) target = $region49
    $region48: #{average_pre_classify.3} parent=1 // pred_region
      %s1326 = ssub.s32 32, 32
      %1327 = vsyncadd [#allocation4], %s1326
      %s1329 = sshll.u32 [#allocation3], 4
      %s1330 = int_to_ptr.vmem [resolvable:$true] %s1329
      %1332 = dma.vmem_to_hbm [thread:$0]  %s1330, 32, %s9, [#allocation4]
    $region49: #{average_pre_classify.3} parent=1 // pred_fallthru
      _
    // Predicated region
    $region50: #{average_pre_classify.3} parent=1 // pred_check
      _
    $region51: #{average_pre_classify.3} parent=1 // pred_check_branch
      %1334 = sbr.rel (0) target = $region53
    $region52: #{average_pre_classify.3} parent=1 // pred_region
      %1335 = dma.done [#allocation4], 32
    $region53: #{average_pre_classify.3} parent=1 // pred_fallthru
      _
    %1336 = vsyncpa [#allocation4], 1

</llo_original>
